<compile_context>
chip_gen: v7x
topology: tpu7x:2x2x1
jax: 0.10.0
libtpu: 0.0.40
codegen_flags: <defaults>
</compile_context>

<pallas_src>
import jax
import jax.numpy as jnp
from jax.experimental import pallas as pl
from jax.experimental.pallas import tpu as pltpu

CONSTANT = 2
MOE_TOP_K = 2
_MASK_VAL = float(jnp.finfo(jnp.float32).min)


def _round_up(a, b):
    return -(-a // b) * b


# ------------------------------ fused kernel ------------------------------- #

def _make_fused_kernel(num_experts, intermediate_size):
    E = num_experts
    I = intermediate_size
    RH = 8 * E
    # Fused weight column layout: [gate(I) | up(I) | router_hidden(8E) | ce_logits(4) | pad]
    OFF_G, OFF_U, OFF_R, OFF_C = 0, I, 2 * I, 2 * I + RH

    def kernel(x_ref, wbig_ref, wr2_ref, wdn_ref, const_ref, o_ref, logits_ref):
        x = x_ref[...]                                   # (tm, H) bf16
        x32 = x.astype(jnp.float32)

        # ---- One MXU stream for everything that multiplies x.
        fused = jnp.dot(x, wbig_ref[...], preferred_element_type=jnp.float32)  # (tm, Wp)
        gate = fused[:, OFF_G:OFF_G + I]
        up = fused[:, OFF_U:OFF_U + I]
        rh = fused[:, OFF_R:OFF_R + RH]
        ce_l = fused[:, OFF_C:OFF_C + 2 * CONSTANT]

        # ---- Router gate MLP second layer; logits emitted lane-dense in bf16 and the
        #      routing below uses exactly the emitted (rounded) values.
        h = jnp.tanh(rh)
        logits32 = jnp.dot(h.astype(jnp.bfloat16), wr2_ref[...],
                           preferred_element_type=jnp.float32)       # (tm, Ep)
        logits_bf = logits32.astype(jnp.bfloat16)
        logits_ref[...] = logits_bf
        logits = logits_bf.astype(jnp.float32)

        # ---- Top-2 routing over the first E (real) columns.
        col = jax.lax.broadcasted_iota(jnp.int32, logits.shape, 1)
        colf = col.astype(jnp.float32)
        oob = jnp.float32(logits.shape[-1])
        lg = jnp.where(col < E, logits, _MASK_VAL)
        l1 = jnp.max(lg, axis=-1, keepdims=True)
        i1 = jnp.min(jnp.where(lg == l1, colf, oob), axis=-1, keepdims=True)
        lg2 = jnp.where(colf == i1, _MASK_VAL, lg)
        l2 = jnp.max(lg2, axis=-1, keepdims=True)
        i2 = jnp.min(jnp.where(lg2 == l2, colf, oob), axis=-1, keepdims=True)

        # softmax -> top-2 -> zero-last-expert -> renormalize == sigmoid of the logit gap.
        w1 = jax.nn.sigmoid(l1 - l2)
        w2 = 1.0 - w1
        last = float(E - 1)
        w1 = jnp.where(i1 == last, 0.0, jnp.where(i2 == last, 1.0, w1))
        w2 = jnp.where(i2 == last, 0.0, jnp.where(i1 == last, 1.0, w2))

        def coef(s1, s2):
            return jnp.where(s1, w1, 0.0) + jnp.where(s2, w2, 0.0)

        c_copy = coef(i1 == 0.0, i2 == 0.0)              # expert 0: CopyExpert
        c_ce0 = coef(i1 == 2.0, i2 == 2.0)               # expert 2: ConstantExpert 0
        c_ce1 = coef(i1 == 3.0, i2 == 3.0)               # expert 3: ConstantExpert 1
        mlp_lo = float(CONSTANT + 2)
        c_mlp = coef(i1 >= mlp_lo, i2 >= mlp_lo)         # experts 4..: shared Expert MLP
        # expert 1 (ZeroExpert) contributes nothing.

        # ---- Shared Expert MLP (SiLU-gated).
        gate = gate * jax.nn.sigmoid(gate)               # SiLU (EUP)
        mlp = jnp.dot((gate * up).astype(jnp.bfloat16), wdn_ref[...],
                      preferred_element_type=jnp.float32)            # (tm, H)

        # ---- ConstantExperts: 2-way softmax == sigmoid of the logit gap.
        p0_a = jax.nn.sigmoid(ce_l[:, 0:1] - ce_l[:, 1:2])
        p0_b = jax.nn.sigmoid(ce_l[:, 2:3] - ce_l[:, 3:4])

        # ---- Combine, folded onto (tm,1) coefficients (no (tm,H) ConstantExpert temps).
        consts = const_ref[...]                          # (CONSTANT, H) f32
        c_x = c_copy + c_ce0 * p0_a + c_ce1 * p0_b
        c_k0 = c_ce0 * (1.0 - p0_a)
        c_k1 = c_ce1 * (1.0 - p0_b)
        out = c_x * x32 + c_mlp * mlp + c_k0 * consts[0:1, :] + c_k1 * consts[1:2, :]
        o_ref[...] = out.astype(o_ref.dtype)

    return kernel


# ------------------------------- planning ----------------------------------- #

def _vmem_plan():
    """(vmem_limit_bytes, planning_budget_bytes, tm_cap), generation-aware."""
    phys = 64 * 1024 * 1024          # conservative default if the query is unavailable
    try:
        info = pltpu.get_tpu_info()
        phys = int(getattr(info, "vmem_capacity_bytes", phys) or phys)
    except Exception:
        pass
    if phys <= 64 * 1024 * 1024:
        # v7x-class: leave headroom for compiler scratch / DMA descriptors.
        limit = (phys * 13) // 16                 # ~52 MiB of 64
        budget = (limit * 3) // 4
        tm_cap = 512
    else:
        # v5e / v6e: 128 MiB VMEM; large token tiles amortize per-grid-step overhead.
        limit = min(phys - 24 * 1024 * 1024, 104 * 1024 * 1024)
        budget = (limit * 7) // 8
        tm_cap = 1024
    return limit, budget, tm_cap


def _choose_tm(n_tokens, hidden, inter, num_experts, wbig_lanes, out_itemsize,
               budget_bytes, tm_cap, weight_buffers):
    """Largest token tile (multiple of 8, <= tm_cap) whose VMEM footprint fits the budget."""
    ep = _round_up(num_experts, 128)
    w_bytes = weight_buffers * (
        2 * (hidden * wbig_lanes + 8 * num_experts * ep + inter * hidden)   # bf16 weights
        + 4 * CONSTANT * hidden)                                            # f32 constants
    if w_bytes > budget_bytes:
        # TODO(synk): switch to the I-split streamed-weight variant instead of failing.
        raise ValueError(
            f"Resident expert weights ({w_bytes} B) exceed the VMEM planning budget "
            f"({budget_bytes} B); this shape needs the streamed-weight (I-split) path.")
    tm = tm_cap
    while tm > 8:
        io = 2 * (tm * hidden * 2) + 2 * (tm * hidden * out_itemsize) + 2 * (tm * ep * 2)
        interm = tm * (2 * wbig_lanes + 2 * hidden + ep) * 4    # f32 intermediates, slack
        if w_bytes + io + interm <= budget_bytes:
            break
        tm //= 2
    return min(tm, _round_up(max(n_tokens, 8), 8))


# -------------------------------- wrapper ----------------------------------- #

def _build_call(E, I, H, Wp, Ep, tm, Np, out_dtype, vmem_limit, single_buffer_weights):
    kernel = _make_fused_kernel(E, I)

    wkw = {}
    if single_buffer_weights and hasattr(pl, "Buffered"):
        wkw = dict(pipeline_mode=pl.Buffered(1))     # grid-invariant -> single buffer

    def wspec(shape):
        return pl.BlockSpec(shape, lambda i: (0, 0), **wkw)

    out_isz = jnp.dtype(out_dtype).itemsize
    w_bytes_once = 2 * (H * Wp + 8 * E * Ep + I * H) + 4 * CONSTANT * H
    cost = pl.CostEstimate(
        flops=2 * Np * (H * Wp + 8 * E * Ep + I * H),
        transcendentals=Np * (I + 8 * E + 8),
        bytes_accessed=Np * H * 2 + Np * H * out_isz + Np * Ep * 2 + w_bytes_once,
    )

    return pl.pallas_call(
        kernel,
        out_shape=(jax.ShapeDtypeStruct((Np, H), out_dtype),
                   jax.ShapeDtypeStruct((Np, Ep), jnp.bfloat16)),
        grid_spec=pltpu.PrefetchScalarGridSpec(
            num_scalar_prefetch=0,
            grid=(Np // tm,),
            in_specs=[
                pl.BlockSpec((tm, H), lambda i: (i, 0)),   # x tile
                wspec((H, Wp)),                            # fused [gate|up|router1|ce] weight
                wspec((8 * E, Ep)),                        # router W2 (lane-padded)
                wspec((I, H)),                             # down-proj weight
                wspec((CONSTANT, H)),                      # learned constants (f32)
            ],
            out_specs=[
                pl.BlockSpec((tm, H), lambda i: (i, 0)),
                pl.BlockSpec((tm, Ep), lambda i: (i, 0)),
            ],
        ),
        compiler_params=pltpu.CompilerParams(
            dimension_semantics=("parallel",),
            vmem_limit_bytes=vmem_limit,
        ),
        cost_estimate=cost,
    )


def moe_layer_forward(hidden_states, kparams):
    """Equivalent of MOELayer.forward(hidden_states, pre_router_residual=None)."""
    B, S, H = hidden_states.shape
    E = kparams["num_experts"]
    I = kparams["intermediate_size"]
    Wp = kparams["wbig"].shape[1]
    Ep = kparams["wr2p"].shape[1]
    out_dtype = hidden_states.dtype

    x = hidden_states.reshape(-1, H)
    N = x.shape[0]

    vmem_limit, budget, tm_cap = _vmem_plan()
    single_buffer = hasattr(pl, "Buffered")
    tm = _choose_tm(N, H, I, E, Wp, jnp.dtype(out_dtype).itemsize, budget, tm_cap,
                    1 if single_buffer else 2)
    Np = pl.cdiv(N, tm) * tm

    xb = x.astype(jnp.bfloat16)
    if Np != N:
        xb = jnp.pad(xb, ((0, Np - N), (0, 0)))

    args = (xb, kparams["wbig"], kparams["wr2p"], kparams["wdn"], kparams["ce_const"])
    try:
        out, logits_pad = _build_call(E, I, H, Wp, Ep, tm, Np, out_dtype,
                                      vmem_limit, single_buffer)(*args)
    except Exception:
        if not single_buffer:
            raise
        # Fallback: default (double-buffered) weight pipelining if this JAX build
        # rejects pipeline_mode=pl.Buffered(1) on this pallas_call path.
        out, logits_pad = _build_call(E, I, H, Wp, Ep, tm, Np, out_dtype,
                                      vmem_limit, False)(*args)

    out = out[:N].reshape(B, S, H)
    router_logits = logits_pad[:N, :E].astype(jnp.float32)
    return out, router_logits


# --------------------------- pure-JAX reference ----------------------------- #

def _routing_coefs(logits, num_experts):
    """softmax -> top-k -> zero last expert -> renormalize -> 4-way coefficient matrix."""
    probs = jax.nn.softmax(logits, axis=-1)
    w, idx = jax.lax.top_k(probs, MOE_TOP_K)
    w = jnp.where(idx == num_experts - 1, jnp.zeros_like(w), w)
    w = w / jnp.sum(w, axis=-1, keepdims=True)
    onehot = jax.nn.one_hot(idx, num_experts, dtype=jnp.float32)
    coef = jnp.einsum("nk,nke->ne", w, onehot)
    # Experts: [0]=Copy, [1]=Zero, [2..3]=ConstantExperts, [4..]=shared Expert MLP.
    return jnp.stack(
        [coef[:, 0], coef[:, 2], coef[:, 3],
         jnp.sum(coef[:, CONSTANT + 2:], axis=-1)], axis=-1)


def reference_forward(hidden_states, params, logits_override=None):
    hp = jax.lax.Precision.HIGHEST
    B, S, H = hidden_states.shape
    E = params["num_experts"]

    def bf(w):  # same bf16 rounding the kernel applies to its operands
        return w.astype(jnp.bfloat16).astype(jnp.float32)

    x = hidden_states.reshape(-1, H).astype(jnp.bfloat16).astype(jnp.float32)

    logits = jnp.dot(jnp.tanh(jnp.dot(x, bf(params["router_w1_t"]), precision=hp)),
                     bf(params["router_w2_t"]), precision=hp)
    coef4 = _routing_coefs(logits if logits_override is None else logits_override, E)

    gate = jnp.dot(x, bf(params["w_gate_t"]), precision=hp)
    gate = gate * jax.nn.sigmoid(gate)
    up = jnp.dot(x, bf(params["w_up_t"]), precision=hp)
    mlp = jnp.dot(gate * up, bf(params["w_down_t"]), precision=hp)

    wce = bf(params["wce_t"])
    ces = []
    for c in range(CONSTANT):
        l = jnp.dot(x, wce[:, 2 * c:2 * c + 2], precision=hp)
        p = jax.nn.softmax(l, axis=-1)
        ces.append(p[:, 0:1] * x + p[:, 1:2] * params["ce_const"][c][None, :])

    out = (coef4[:, 0:1] * x + coef4[:, 1:2] * ces[0]
           + coef4[:, 2:3] * ces[1] + coef4[:, 3:4] * mlp)
    return out.reshape(B, S, H), logits


# ------------------------------- param init --------------------------------- #

def init_params(key, hidden_size, intermediate_size, num_experts):
    ks = jax.random.split(key, 7)
    s = 0.1
    return dict(
        num_experts=num_experts,
        hidden_size=hidden_size,
        intermediate_size=intermediate_size,
        # shared Expert (torch Linear weight (out,in) -> stored transposed (in,out))
        w_gate_t=jax.random.normal(ks[0], (hidden_size, intermediate_size), jnp.float32) * s,
        w_up_t=jax.random.normal(ks[1], (hidden_size, intermediate_size), jnp.float32) * s,
        w_down_t=jax.random.normal(ks[2], (intermediate_size, hidden_size), jnp.float32) * s,
        # two ConstantExperts: wg (2,H) each, packed as (H, 4); constants (2, H)
        wce_t=jax.random.normal(ks[3], (hidden_size, 2 * CONSTANT), jnp.float32) * s,
        ce_const=jax.random.normal(ks[4], (CONSTANT, hidden_size), jnp.float32),
        # Router gate MLP (is_gate_mlp=True): Linear(H, E*8) -> Tanh -> Linear(E*8, E)
        router_w1_t=jax.random.normal(ks[5], (hidden_size, num_experts * 8), jnp.float32) * s,
        router_w2_t=jax.random.normal(ks[6], (num_experts * 8, num_experts), jnp.float32) * s,
    )


def prepare_kernel_params(p):
    """Cast / concatenate / lane-pad weights into the layout the fused kernel expects."""
    E = p["num_experts"]
    I = p["intermediate_size"]
    H = p["hidden_size"]
    Ep = _round_up(E, 128)
    W = 2 * I + 8 * E + 2 * CONSTANT
    Wp = _round_up(W, 128)
    wbig = jnp.concatenate(
        [p["w_gate_t"], p["w_up_t"], p["router_w1_t"], p["wce_t"]], axis=1)
    if Wp != W:
        wbig = jnp.pad(wbig, ((0, 0), (0, Wp - W)))
    wr2p = jnp.pad(p["router_w2_t"], ((0, 0), (0, Ep - E)))
    return dict(
        num_experts=E,
        intermediate_size=I,
        hidden_size=H,
        wbig=wbig.astype(jnp.bfloat16),
        wr2p=wr2p.astype(jnp.bfloat16),
        wdn=p["w_down_t"].astype(jnp.bfloat16),
        ce_const=p["ce_const"].astype(jnp.float32),
    )


if __name__ == "__main__":
    B, S, H, I, E = 2, 8, 128, 256, 8
    key = jax.random.PRNGKey(0)
    k_x, k_p = jax.random.split(key)
    hidden = jax.random.normal(k_x, (B, S, H), jnp.float32)
    params = init_params(k_p, H, I, E)
    kparams = prepare_kernel_params(params)

    out, router_logits = moe_layer_forward(hidden, kparams)
    out = jax.block_until_ready(out)
    router_logits = jax.block_until_ready(router_logits)
    assert out.shape == (B, S, H) and router_logits.shape == (B * S, E)

    # Drive the reference's discrete top-2 routing with the kernel's own logits so that a
    # bf16-induced near-tie cannot flip expert selection between the two paths; the logits
    # themselves are checked independently below.
    ref_out, ref_logits = reference_forward(hidden, params, logits_override=router_logits)
    assert jnp.allclose(router_logits, ref_logits, rtol=2e-2, atol=2e-2)
    assert jnp.allclose(out, ref_out, rtol=2e-2, atol=2e-2)

    print("KERNEL_OK")
</pallas_src>

<mosaic_0001>
module attributes {stable_mosaic.version = 11 : i64} {
  func.func @kernel(%arg0: i32, %arg1: memref<16x128xbf16, #tpu.memory_space<vmem>>, %arg2: memref<128x640xbf16, #tpu.memory_space<vmem>>, %arg3: memref<64x128xbf16, #tpu.memory_space<vmem>>, %arg4: memref<256x128xbf16, #tpu.memory_space<vmem>>, %arg5: memref<2x128xf32, #tpu.memory_space<vmem>>, %arg6: memref<16x128xf32, #tpu.memory_space<vmem>>, %arg7: memref<16x128xbf16, #tpu.memory_space<vmem>>) attributes {dimension_semantics = [#tpu.dimension_semantics<parallel>], iteration_bounds = array<i64: 1>, scalar_prefetch = 0 : i64, scratch_operands = 0 : i64, tpu.core_type = #tpu.core_type<tc>, window_params = [{transform_indices = @transform_0, window_bounds = array<i64: 16, 128>}, {pipeline_mode = #tpu.pipeline_mode<synchronous>, transform_indices = @transform_1, window_bounds = array<i64: 128, 640>}, {pipeline_mode = #tpu.pipeline_mode<synchronous>, transform_indices = @transform_2, window_bounds = array<i64: 64, 128>}, {pipeline_mode = #tpu.pipeline_mode<synchronous>, transform_indices = @transform_3, window_bounds = array<i64: 256, 128>}, {pipeline_mode = #tpu.pipeline_mode<synchronous>, transform_indices = @transform_4, window_bounds = array<i64: 2, 128>}, {transform_indices = @transform_5, window_bounds = array<i64: 16, 128>}, {transform_indices = @transform_6, window_bounds = array<i64: 16, 128>}]} {
    %c0 = arith.constant 0 : index
    %c0_0 = arith.constant 0 : index
    %0 = vector.load %arg1[%c0, %c0_0] : memref<16x128xbf16, #tpu.memory_space<vmem>>, vector<16x128xbf16>
    %1 = arith.extf %0 : vector<16x128xbf16> to vector<16x128xf32>
    %c0_1 = arith.constant 0 : index
    %c0_2 = arith.constant 0 : index
    %2 = vector.load %arg2[%c0_1, %c0_2] : memref<128x640xbf16, #tpu.memory_space<vmem>>, vector<128x640xbf16>
    %cst = arith.constant dense<0.000000e+00> : vector<16x640xf32>
    %3 = tpu.matmul %0, %2, %cst {dimension_numbers = #tpu.dot_dimension_numbers<[1], [0], [0], [1], [0, 0, 1, 1], [], []>} : vector<16x128xbf16>, vector<128x640xbf16>, vector<16x640xf32> -> vector<16x640xf32>
    %4 = vector.extract_strided_slice %3 {offsets = [0, 0], sizes = [16, 256], strides = [1, 1]} : vector<16x640xf32> to vector<16x256xf32>
    %5 = vector.extract_strided_slice %3 {offsets = [0, 256], sizes = [16, 256], strides = [1, 1]} : vector<16x640xf32> to vector<16x256xf32>
    %6 = vector.extract_strided_slice %3 {offsets = [0, 512], sizes = [16, 64], strides = [1, 1]} : vector<16x640xf32> to vector<16x64xf32>
    %7 = vector.extract_strided_slice %3 {offsets = [0, 576], sizes = [16, 4], strides = [1, 1]} : vector<16x640xf32> to vector<16x4xf32>
    %8 = math.tanh %6 : vector<16x64xf32>
    %9 = arith.truncf %8 : vector<16x64xf32> to vector<16x64xbf16>
    %c0_3 = arith.constant 0 : index
    %c0_4 = arith.constant 0 : index
    %10 = vector.load %arg3[%c0_3, %c0_4] : memref<64x128xbf16, #tpu.memory_space<vmem>>, vector<64x128xbf16>
    %cst_5 = arith.constant dense<0.000000e+00> : vector<16x128xf32>
    %11 = tpu.matmul %9, %10, %cst_5 {dimension_numbers = #tpu.dot_dimension_numbers<[1], [0], [0], [1], [0, 0, 1, 1], [], []>} : vector<16x64xbf16>, vector<64x128xbf16>, vector<16x128xf32> -> vector<16x128xf32>
    %12 = arith.truncf %11 : vector<16x128xf32> to vector<16x128xbf16>
    %c0_6 = arith.constant 0 : index
    %c0_7 = arith.constant 0 : index
    %13 = vector.load %arg7[%c0_6, %c0_7] : memref<16x128xbf16, #tpu.memory_space<vmem>>, vector<16x128xbf16>
    tpu.vector_store %arg7[%c0_6, %c0_7], %12 {strides = array<i32>} : memref<16x128xbf16, #tpu.memory_space<vmem>>, vector<16x128xbf16>,
    %14 = arith.extf %12 : vector<16x128xbf16> to vector<16x128xf32>
    %15 = tpu.iota {dimensions = array<i32: 1>} : vector<16x128xi32>
    %16 = arith.sitofp %15 : vector<16x128xi32> to vector<16x128xf32>
    %c8_i32 = arith.constant 8 : i32
    %17 = vector.broadcast %c8_i32 : i32 to vector<16x128xi32>
    %18 = arith.cmpi slt, %15, %17 : vector<16x128xi32>
    %cst_8 = arith.constant -3.40282347E+38 : f32
    %19 = vector.broadcast %cst_8 : f32 to vector<16x128xf32>
    %20 = arith.select %18, %14, %19 : vector<16x128xi1>, vector<16x128xf32>
    %cst_9 = arith.constant dense<0xFF800000> : vector<16xf32>
    %21 = vector.multi_reduction <maximumf>, %20, %cst_9 [1] : vector<16x128xf32> to vector<16xf32>
    %22 = vector.shape_cast %21 : vector<16xf32> to vector<16x1xf32>
    %23 = vector.broadcast %22 : vector<16x1xf32> to vector<16x128xf32>
    %24 = arith.cmpf oeq, %20, %23 : vector<16x128xf32>
    %cst_10 = arith.constant 1.280000e+02 : f32
    %25 = vector.broadcast %cst_10 : f32 to vector<16x128xf32>
    %26 = arith.select %24, %16, %25 : vector<16x128xi1>, vector<16x128xf32>
    %cst_11 = arith.constant dense<0x7F800000> : vector<16xf32>
    %27 = vector.multi_reduction <minimumf>, %26, %cst_11 [1] : vector<16x128xf32> to vector<16xf32>
    %28 = vector.shape_cast %27 : vector<16xf32> to vector<16x1xf32>
    %29 = vector.broadcast %28 : vector<16x1xf32> to vector<16x128xf32>
    %30 = arith.cmpf oeq, %16, %29 : vector<16x128xf32>
    %cst_12 = arith.constant -3.40282347E+38 : f32
    %31 = vector.broadcast %cst_12 : f32 to vector<16x128xf32>
    %32 = arith.select %30, %31, %20 : vector<16x128xi1>, vector<16x128xf32>
    %cst_13 = arith.constant dense<0xFF800000> : vector<16xf32>
    %33 = vector.multi_reduction <maximumf>, %32, %cst_13 [1] : vector<16x128xf32> to vector<16xf32>
    %34 = vector.shape_cast %33 : vector<16xf32> to vector<16x1xf32>
    %35 = vector.broadcast %34 : vector<16x1xf32> to vector<16x128xf32>
    %36 = arith.cmpf oeq, %32, %35 : vector<16x128xf32>
    %cst_14 = arith.constant 1.280000e+02 : f32
    %37 = vector.broadcast %cst_14 : f32 to vector<16x128xf32>
    %38 = arith.select %36, %16, %37 : vector<16x128xi1>, vector<16x128xf32>
    %cst_15 = arith.constant dense<0x7F800000> : vector<16xf32>
    %39 = vector.multi_reduction <minimumf>, %38, %cst_15 [1] : vector<16x128xf32> to vector<16xf32>
    %40 = vector.shape_cast %39 : vector<16xf32> to vector<16x1xf32>
    %41 = arith.subf %22, %34 : vector<16x1xf32>
    %42 = arith.negf %41 : vector<16x1xf32>
    %43 = math.exp %42 : vector<16x1xf32>
    %cst_16 = arith.constant 1.000000e+00 : f32
    %44 = vector.broadcast %cst_16 : f32 to vector<16x1xf32>
    %45 = arith.addf %44, %43 : vector<16x1xf32>
    %46 = arith.divf %44, %45 : vector<16x1xf32>
    %cst_17 = arith.constant 1.000000e+00 : f32
    %47 = vector.broadcast %cst_17 : f32 to vector<16x1xf32>
    %48 = arith.subf %47, %46 : vector<16x1xf32>
    %cst_18 = arith.constant 7.000000e+00 : f32
    %49 = vector.broadcast %cst_18 : f32 to vector<16x1xf32>
    %50 = arith.cmpf oeq, %28, %49 : vector<16x1xf32>
    %cst_19 = arith.constant 7.000000e+00 : f32
    %51 = vector.broadcast %cst_19 : f32 to vector<16x1xf32>
    %52 = arith.cmpf oeq, %40, %51 : vector<16x1xf32>
    %cst_20 = arith.constant 1.000000e+00 : f32
    %53 = vector.broadcast %cst_20 : f32 to vector<16x1xf32>
    %54 = arith.select %52, %53, %46 : vector<16x1xi1>, vector<16x1xf32>
    %cst_21 = arith.constant 0.000000e+00 : f32
    %55 = vector.broadcast %cst_21 : f32 to vector<16x1xf32>
    %56 = arith.select %50, %55, %54 : vector<16x1xi1>, vector<16x1xf32>
    %cst_22 = arith.constant 7.000000e+00 : f32
    %57 = vector.broadcast %cst_22 : f32 to vector<16x1xf32>
    %58 = arith.cmpf oeq, %40, %57 : vector<16x1xf32>
    %cst_23 = arith.constant 7.000000e+00 : f32
    %59 = vector.broadcast %cst_23 : f32 to vector<16x1xf32>
    %60 = arith.cmpf oeq, %28, %59 : vector<16x1xf32>
    %cst_24 = arith.constant 1.000000e+00 : f32
    %61 = vector.broadcast %cst_24 : f32 to vector<16x1xf32>
    %62 = arith.select %60, %61, %48 : vector<16x1xi1>, vector<16x1xf32>
    %cst_25 = arith.constant 0.000000e+00 : f32
    %63 = vector.broadcast %cst_25 : f32 to vector<16x1xf32>
    %64 = arith.select %58, %63, %62 : vector<16x1xi1>, vector<16x1xf32>
    %cst_26 = arith.constant 0.000000e+00 : f32
    %65 = vector.broadcast %cst_26 : f32 to vector<16x1xf32>
    %66 = arith.cmpf oeq, %28, %65 : vector<16x1xf32>
    %cst_27 = arith.constant 0.000000e+00 : f32
    %67 = vector.broadcast %cst_27 : f32 to vector<16x1xf32>
    %68 = arith.cmpf oeq, %40, %67 : vector<16x1xf32>
    %cst_28 = arith.constant 0.000000e+00 : f32
    %69 = vector.broadcast %cst_28 : f32 to vector<16x1xf32>
    %70 = arith.select %66, %56, %69 : vector<16x1xi1>, vector<16x1xf32>
    %cst_29 = arith.constant 0.000000e+00 : f32
    %71 = vector.broadcast %cst_29 : f32 to vector<16x1xf32>
    %72 = arith.select %68, %64, %71 : vector<16x1xi1>, vector<16x1xf32>
    %73 = arith.addf %70, %72 : vector<16x1xf32>
    %cst_30 = arith.constant 2.000000e+00 : f32
    %74 = vector.broadcast %cst_30 : f32 to vector<16x1xf32>
    %75 = arith.cmpf oeq, %28, %74 : vector<16x1xf32>
    %cst_31 = arith.constant 2.000000e+00 : f32
    %76 = vector.broadcast %cst_31 : f32 to vector<16x1xf32>
    %77 = arith.cmpf oeq, %40, %76 : vector<16x1xf32>
    %cst_32 = arith.constant 0.000000e+00 : f32
    %78 = vector.broadcast %cst_32 : f32 to vector<16x1xf32>
    %79 = arith.select %75, %56, %78 : vector<16x1xi1>, vector<16x1xf32>
    %cst_33 = arith.constant 0.000000e+00 : f32
    %80 = vector.broadcast %cst_33 : f32 to vector<16x1xf32>
    %81 = arith.select %77, %64, %80 : vector<16x1xi1>, vector<16x1xf32>
    %82 = arith.addf %79, %81 : vector<16x1xf32>
    %cst_34 = arith.constant 3.000000e+00 : f32
    %83 = vector.broadcast %cst_34 : f32 to vector<16x1xf32>
    %84 = arith.cmpf oeq, %28, %83 : vector<16x1xf32>
    %cst_35 = arith.constant 3.000000e+00 : f32
    %85 = vector.broadcast %cst_35 : f32 to vector<16x1xf32>
    %86 = arith.cmpf oeq, %40, %85 : vector<16x1xf32>
    %cst_36 = arith.constant 0.000000e+00 : f32
    %87 = vector.broadcast %cst_36 : f32 to vector<16x1xf32>
    %88 = arith.select %84, %56, %87 : vector<16x1xi1>, vector<16x1xf32>
    %cst_37 = arith.constant 0.000000e+00 : f32
    %89 = vector.broadcast %cst_37 : f32 to vector<16x1xf32>
    %90 = arith.select %86, %64, %89 : vector<16x1xi1>, vector<16x1xf32>
    %91 = arith.addf %88, %90 : vector<16x1xf32>
    %cst_38 = arith.constant 4.000000e+00 : f32
    %92 = vector.broadcast %cst_38 : f32 to vector<16x1xf32>
    %93 = arith.cmpf oge, %28, %92 : vector<16x1xf32>
    %cst_39 = arith.constant 4.000000e+00 : f32
    %94 = vector.broadcast %cst_39 : f32 to vector<16x1xf32>
    %95 = arith.cmpf oge, %40, %94 : vector<16x1xf32>
    %cst_40 = arith.constant 0.000000e+00 : f32
    %96 = vector.broadcast %cst_40 : f32 to vector<16x1xf32>
    %97 = arith.select %93, %56, %96 : vector<16x1xi1>, vector<16x1xf32>
    %cst_41 = arith.constant 0.000000e+00 : f32
    %98 = vector.broadcast %cst_41 : f32 to vector<16x1xf32>
    %99 = arith.select %95, %64, %98 : vector<16x1xi1>, vector<16x1xf32>
    %100 = arith.addf %97, %99 : vector<16x1xf32>
    %101 = arith.negf %4 : vector<16x256xf32>
    %102 = math.exp %101 : vector<16x256xf32>
    %cst_42 = arith.constant 1.000000e+00 : f32
    %103 = vector.broadcast %cst_42 : f32 to vector<16x256xf32>
    %104 = arith.addf %103, %102 : vector<16x256xf32>
    %105 = arith.divf %103, %104 : vector<16x256xf32>
    %106 = arith.mulf %4, %105 : vector<16x256xf32>
    %107 = arith.mulf %106, %5 : vector<16x256xf32>
    %108 = arith.truncf %107 : vector<16x256xf32> to vector<16x256xbf16>
    %c0_43 = arith.constant 0 : index
    %c0_44 = arith.constant 0 : index
    %109 = vector.load %arg4[%c0_43, %c0_44] : memref<256x128xbf16, #tpu.memory_space<vmem>>, vector<256x128xbf16>
    %cst_45 = arith.constant dense<0.000000e+00> : vector<16x128xf32>
    %110 = tpu.matmul %108, %109, %cst_45 {dimension_numbers = #tpu.dot_dimension_numbers<[1], [0], [0], [1], [0, 0, 1, 1], [], []>} : vector<16x256xbf16>, vector<256x128xbf16>, vector<16x128xf32> -> vector<16x128xf32>
    %111 = vector.extract_strided_slice %7 {offsets = [0, 0], sizes = [16, 1], strides = [1, 1]} : vector<16x4xf32> to vector<16x1xf32>
    %112 = vector.extract_strided_slice %7 {offsets = [0, 1], sizes = [16, 1], strides = [1, 1]} : vector<16x4xf32> to vector<16x1xf32>
    %113 = arith.subf %111, %112 : vector<16x1xf32>
    %114 = arith.negf %113 : vector<16x1xf32>
    %115 = math.exp %114 : vector<16x1xf32>
    %cst_46 = arith.constant 1.000000e+00 : f32
    %116 = vector.broadcast %cst_46 : f32 to vector<16x1xf32>
    %117 = arith.addf %116, %115 : vector<16x1xf32>
    %118 = arith.divf %116, %117 : vector<16x1xf32>
    %119 = vector.extract_strided_slice %7 {offsets = [0, 2], sizes = [16, 1], strides = [1, 1]} : vector<16x4xf32> to vector<16x1xf32>
    %120 = vector.extract_strided_slice %7 {offsets = [0, 3], sizes = [16, 1], strides = [1, 1]} : vector<16x4xf32> to vector<16x1xf32>
    %121 = arith.subf %119, %120 : vector<16x1xf32>
    %122 = arith.negf %121 : vector<16x1xf32>
    %123 = math.exp %122 : vector<16x1xf32>
    %cst_47 = arith.constant 1.000000e+00 : f32
    %124 = vector.broadcast %cst_47 : f32 to vector<16x1xf32>
    %125 = arith.addf %124, %123 : vector<16x1xf32>
    %126 = arith.divf %124, %125 : vector<16x1xf32>
    %c0_48 = arith.constant 0 : index
    %c0_49 = arith.constant 0 : index
    %127 = vector.load %arg5[%c0_48, %c0_49] : memref<2x128xf32, #tpu.memory_space<vmem>>, vector<2x128xf32>
    %128 = arith.mulf %82, %118 : vector<16x1xf32>
    %129 = arith.addf %73, %128 : vector<16x1xf32>
    %130 = arith.mulf %91, %126 : vector<16x1xf32>
    %131 = arith.addf %129, %130 : vector<16x1xf32>
    %cst_50 = arith.constant 1.000000e+00 : f32
    %132 = vector.broadcast %cst_50 : f32 to vector<16x1xf32>
    %133 = arith.subf %132, %118 : vector<16x1xf32>
    %134 = arith.mulf %82, %133 : vector<16x1xf32>
    %cst_51 = arith.constant 1.000000e+00 : f32
    %135 = vector.broadcast %cst_51 : f32 to vector<16x1xf32>
    %136 = arith.subf %135, %126 : vector<16x1xf32>
    %137 = arith.mulf %91, %136 : vector<16x1xf32>
    %138 = vector.broadcast %131 : vector<16x1xf32> to vector<16x128xf32>
    %139 = arith.mulf %138, %1 : vector<16x128xf32>
    %140 = vector.broadcast %100 : vector<16x1xf32> to vector<16x128xf32>
    %141 = arith.mulf %140, %110 : vector<16x128xf32>
    %142 = arith.addf %139, %141 : vector<16x128xf32>
    %143 = vector.extract_strided_slice %127 {offsets = [0, 0], sizes = [1, 128], strides = [1, 1]} : vector<2x128xf32> to vector<1x128xf32>
    %144 = vector.broadcast %134 : vector<16x1xf32> to vector<16x128xf32>
    %145 = vector.broadcast %143 : vector<1x128xf32> to vector<16x128xf32>
    %146 = arith.mulf %144, %145 : vector<16x128xf32>
    %147 = arith.addf %142, %146 : vector<16x128xf32>
    %148 = vector.extract_strided_slice %127 {offsets = [1, 0], sizes = [1, 128], strides = [1, 1]} : vector<2x128xf32> to vector<1x128xf32>
    %149 = vector.broadcast %137 : vector<16x1xf32> to vector<16x128xf32>
    %150 = vector.broadcast %148 : vector<1x128xf32> to vector<16x128xf32>
    %151 = arith.mulf %149, %150 : vector<16x128xf32>
    %152 = arith.addf %147, %151 : vector<16x128xf32>
    %c0_52 = arith.constant 0 : index
    %c0_53 = arith.constant 0 : index
    %153 = vector.load %arg6[%c0_52, %c0_53] : memref<16x128xf32, #tpu.memory_space<vmem>>, vector<16x128xf32>
    tpu.vector_store %arg6[%c0_52, %c0_53], %152 {strides = array<i32>} : memref<16x128xf32, #tpu.memory_space<vmem>>, vector<16x128xf32>,
    return
  }
  func.func @transform_0(%arg0: i32) -> (i32, i32) {
    %c0_i32 = arith.constant 0 : i32
    %c0_i32_0 = arith.constant 0 : i32
    return %arg0, %c0_i32 : i32, i32
  }
  func.func @transform_1(%arg0: i32) -> (i32, i32) {
    %c0_i32 = arith.constant 0 : i32
    %c0_i32_0 = arith.constant 0 : i32
    %c0_i32_1 = arith.constant 0 : i32
    return %c0_i32, %c0_i32_0 : i32, i32
  }
  func.func @transform_2(%arg0: i32) -> (i32, i32) {
    %c0_i32 = arith.constant 0 : i32
    %c0_i32_0 = arith.constant 0 : i32
    %c0_i32_1 = arith.constant 0 : i32
    return %c0_i32, %c0_i32_0 : i32, i32
  }
  func.func @transform_3(%arg0: i32) -> (i32, i32) {
    %c0_i32 = arith.constant 0 : i32
    %c0_i32_0 = arith.constant 0 : i32
    %c0_i32_1 = arith.constant 0 : i32
    return %c0_i32, %c0_i32_0 : i32, i32
  }
  func.func @transform_4(%arg0: i32) -> (i32, i32) {
    %c0_i32 = arith.constant 0 : i32
    %c0_i32_0 = arith.constant 0 : i32
    %c0_i32_1 = arith.constant 0 : i32
    return %c0_i32, %c0_i32_0 : i32, i32
  }
  func.func @transform_5(%arg0: i32) -> (i32, i32) {
    %c0_i32 = arith.constant 0 : i32
    %c0_i32_0 = arith.constant 0 : i32
    return %arg0, %c0_i32 : i32, i32
  }
  func.func @transform_6(%arg0: i32) -> (i32, i32) {
    %c0_i32 = arith.constant 0 : i32
    %c0_i32_0 = arith.constant 0 : i32
    return %arg0, %c0_i32 : i32, i32
  }
}

module attributes {stable_mosaic.version = 11 : i64} {
  func.func @kernel(%arg0: i32, %arg1: memref<16x128xbf16, #tpu.memory_space<vmem>>, %arg2: memref<128x640xbf16, #tpu.memory_space<vmem>>, %arg3: memref<64x128xbf16, #tpu.memory_space<vmem>>, %arg4: memref<256x128xbf16, #tpu.memory_space<vmem>>, %arg5: memref<2x128xf32, #tpu.memory_space<vmem>>, %arg6: memref<16x128xf32, #tpu.memory_space<vmem>>, %arg7: memref<16x128xbf16, #tpu.memory_space<vmem>>) attributes {dimension_semantics = [#tpu.dimension_semantics<parallel>], iteration_bounds = array<i64: 1>, scalar_prefetch = 0 : i64, scratch_operands = 0 : i64, tpu.core_type = #tpu.core_type<tc>, window_params = [{transform_indices = @transform_0, window_bounds = array<i64: 16, 128>}, {pipeline_mode = #tpu.pipeline_mode<synchronous>, transform_indices = @transform_1, window_bounds = array<i64: 128, 640>}, {pipeline_mode = #tpu.pipeline_mode<synchronous>, transform_indices = @transform_2, window_bounds = array<i64: 64, 128>}, {pipeline_mode = #tpu.pipeline_mode<synchronous>, transform_indices = @transform_3, window_bounds = array<i64: 256, 128>}, {pipeline_mode = #tpu.pipeline_mode<synchronous>, transform_indices = @transform_4, window_bounds = array<i64: 2, 128>}, {transform_indices = @transform_5, window_bounds = array<i64: 16, 128>}, {transform_indices = @transform_6, window_bounds = array<i64: 16, 128>}]} {
    %c0 = arith.constant 0 : index
    %c0_0 = arith.constant 0 : index
    %0 = vector.load %arg1[%c0, %c0_0] : memref<16x128xbf16, #tpu.memory_space<vmem>>, vector<16x128xbf16>
    %1 = arith.extf %0 : vector<16x128xbf16> to vector<16x128xf32>
    %c0_1 = arith.constant 0 : index
    %c0_2 = arith.constant 0 : index
    %2 = vector.load %arg2[%c0_1, %c0_2] : memref<128x640xbf16, #tpu.memory_space<vmem>>, vector<128x640xbf16>
    %cst = arith.constant dense<0.000000e+00> : vector<16x640xf32>
    %3 = tpu.matmul %0, %2, %cst {dimension_numbers = #tpu.dot_dimension_numbers<[1], [0], [0], [1], [0, 0, 1, 1], [], []>} : vector<16x128xbf16>, vector<128x640xbf16>, vector<16x640xf32> -> vector<16x640xf32>
    %4 = vector.extract_strided_slice %3 {offsets = [0, 0], sizes = [16, 256], strides = [1, 1]} : vector<16x640xf32> to vector<16x256xf32>
    %5 = vector.extract_strided_slice %3 {offsets = [0, 256], sizes = [16, 256], strides = [1, 1]} : vector<16x640xf32> to vector<16x256xf32>
    %6 = vector.extract_strided_slice %3 {offsets = [0, 512], sizes = [16, 64], strides = [1, 1]} : vector<16x640xf32> to vector<16x64xf32>
    %7 = vector.extract_strided_slice %3 {offsets = [0, 576], sizes = [16, 4], strides = [1, 1]} : vector<16x640xf32> to vector<16x4xf32>
    %8 = math.tanh %6 : vector<16x64xf32>
    %9 = arith.truncf %8 : vector<16x64xf32> to vector<16x64xbf16>
    %c0_3 = arith.constant 0 : index
    %c0_4 = arith.constant 0 : index
    %10 = vector.load %arg3[%c0_3, %c0_4] : memref<64x128xbf16, #tpu.memory_space<vmem>>, vector<64x128xbf16>
    %cst_5 = arith.constant dense<0.000000e+00> : vector<16x128xf32>
    %11 = tpu.matmul %9, %10, %cst_5 {dimension_numbers = #tpu.dot_dimension_numbers<[1], [0], [0], [1], [0, 0, 1, 1], [], []>} : vector<16x64xbf16>, vector<64x128xbf16>, vector<16x128xf32> -> vector<16x128xf32>
    %12 = arith.truncf %11 : vector<16x128xf32> to vector<16x128xbf16>
    %c0_6 = arith.constant 0 : index
    %c0_7 = arith.constant 0 : index
    %13 = vector.load %arg7[%c0_6, %c0_7] : memref<16x128xbf16, #tpu.memory_space<vmem>>, vector<16x128xbf16>
    tpu.vector_store %arg7[%c0_6, %c0_7], %12 {strides = array<i32>} : memref<16x128xbf16, #tpu.memory_space<vmem>>, vector<16x128xbf16>,
    %14 = arith.extf %12 : vector<16x128xbf16> to vector<16x128xf32>
    %15 = tpu.iota {dimensions = array<i32: 1>} : vector<16x128xi32>
    %16 = arith.sitofp %15 : vector<16x128xi32> to vector<16x128xf32>
    %c8_i32 = arith.constant 8 : i32
    %17 = vector.broadcast %c8_i32 : i32 to vector<16x128xi32>
    %18 = arith.cmpi slt, %15, %17 : vector<16x128xi32>
    %cst_8 = arith.constant -3.40282347E+38 : f32
    %19 = vector.broadcast %cst_8 : f32 to vector<16x128xf32>
    %20 = arith.select %18, %14, %19 : vector<16x128xi1>, vector<16x128xf32>
    %cst_9 = arith.constant dense<0xFF800000> : vector<16xf32>
    %21 = vector.multi_reduction <maximumf>, %20, %cst_9 [1] : vector<16x128xf32> to vector<16xf32>
    %22 = vector.shape_cast %21 : vector<16xf32> to vector<16x1xf32>
    %23 = vector.broadcast %22 : vector<16x1xf32> to vector<16x128xf32>
    %24 = arith.cmpf oeq, %20, %23 : vector<16x128xf32>
    %cst_10 = arith.constant 1.280000e+02 : f32
    %25 = vector.broadcast %cst_10 : f32 to vector<16x128xf32>
    %26 = arith.select %24, %16, %25 : vector<16x128xi1>, vector<16x128xf32>
    %cst_11 = arith.constant dense<0x7F800000> : vector<16xf32>
    %27 = vector.multi_reduction <minimumf>, %26, %cst_11 [1] : vector<16x128xf32> to vector<16xf32>
    %28 = vector.shape_cast %27 : vector<16xf32> to vector<16x1xf32>
    %29 = vector.broadcast %28 : vector<16x1xf32> to vector<16x128xf32>
    %30 = arith.cmpf oeq, %16, %29 : vector<16x128xf32>
    %cst_12 = arith.constant -3.40282347E+38 : f32
    %31 = vector.broadcast %cst_12 : f32 to vector<16x128xf32>
    %32 = arith.select %30, %31, %20 : vector<16x128xi1>, vector<16x128xf32>
    %cst_13 = arith.constant dense<0xFF800000> : vector<16xf32>
    %33 = vector.multi_reduction <maximumf>, %32, %cst_13 [1] : vector<16x128xf32> to vector<16xf32>
    %34 = vector.shape_cast %33 : vector<16xf32> to vector<16x1xf32>
    %35 = vector.broadcast %34 : vector<16x1xf32> to vector<16x128xf32>
    %36 = arith.cmpf oeq, %32, %35 : vector<16x128xf32>
    %cst_14 = arith.constant 1.280000e+02 : f32
    %37 = vector.broadcast %cst_14 : f32 to vector<16x128xf32>
    %38 = arith.select %36, %16, %37 : vector<16x128xi1>, vector<16x128xf32>
    %cst_15 = arith.constant dense<0x7F800000> : vector<16xf32>
    %39 = vector.multi_reduction <minimumf>, %38, %cst_15 [1] : vector<16x128xf32> to vector<16xf32>
    %40 = vector.shape_cast %39 : vector<16xf32> to vector<16x1xf32>
    %41 = arith.subf %22, %34 : vector<16x1xf32>
    %42 = arith.negf %41 : vector<16x1xf32>
    %43 = math.exp %42 : vector<16x1xf32>
    %cst_16 = arith.constant 1.000000e+00 : f32
    %44 = vector.broadcast %cst_16 : f32 to vector<16x1xf32>
    %45 = arith.addf %44, %43 : vector<16x1xf32>
    %46 = arith.divf %44, %45 : vector<16x1xf32>
    %cst_17 = arith.constant 1.000000e+00 : f32
    %47 = vector.broadcast %cst_17 : f32 to vector<16x1xf32>
    %48 = arith.subf %47, %46 : vector<16x1xf32>
    %cst_18 = arith.constant 7.000000e+00 : f32
    %49 = vector.broadcast %cst_18 : f32 to vector<16x1xf32>
    %50 = arith.cmpf oeq, %28, %49 : vector<16x1xf32>
    %cst_19 = arith.constant 7.000000e+00 : f32
    %51 = vector.broadcast %cst_19 : f32 to vector<16x1xf32>
    %52 = arith.cmpf oeq, %40, %51 : vector<16x1xf32>
    %cst_20 = arith.constant 1.000000e+00 : f32
    %53 = vector.broadcast %cst_20 : f32 to vector<16x1xf32>
    %54 = arith.select %52, %53, %46 : vector<16x1xi1>, vector<16x1xf32>
    %cst_21 = arith.constant 0.000000e+00 : f32
    %55 = vector.broadcast %cst_21 : f32 to vector<16x1xf32>
    %56 = arith.select %50, %55, %54 : vector<16x1xi1>, vector<16x1xf32>
    %cst_22 = arith.constant 7.000000e+00 : f32
    %57 = vector.broadcast %cst_22 : f32 to vector<16x1xf32>
    %58 = arith.cmpf oeq, %40, %57 : vector<16x1xf32>
    %cst_23 = arith.constant 7.000000e+00 : f32
    %59 = vector.broadcast %cst_23 : f32 to vector<16x1xf32>
    %60 = arith.cmpf oeq, %28, %59 : vector<16x1xf32>
    %cst_24 = arith.constant 1.000000e+00 : f32
    %61 = vector.broadcast %cst_24 : f32 to vector<16x1xf32>
    %62 = arith.select %60, %61, %48 : vector<16x1xi1>, vector<16x1xf32>
    %cst_25 = arith.constant 0.000000e+00 : f32
    %63 = vector.broadcast %cst_25 : f32 to vector<16x1xf32>
    %64 = arith.select %58, %63, %62 : vector<16x1xi1>, vector<16x1xf32>
    %cst_26 = arith.constant 0.000000e+00 : f32
    %65 = vector.broadcast %cst_26 : f32 to vector<16x1xf32>
    %66 = arith.cmpf oeq, %28, %65 : vector<16x1xf32>
    %cst_27 = arith.constant 0.000000e+00 : f32
    %67 = vector.broadcast %cst_27 : f32 to vector<16x1xf32>
    %68 = arith.cmpf oeq, %40, %67 : vector<16x1xf32>
    %cst_28 = arith.constant 0.000000e+00 : f32
    %69 = vector.broadcast %cst_28 : f32 to vector<16x1xf32>
    %70 = arith.select %66, %56, %69 : vector<16x1xi1>, vector<16x1xf32>
    %cst_29 = arith.constant 0.000000e+00 : f32
    %71 = vector.broadcast %cst_29 : f32 to vector<16x1xf32>
    %72 = arith.select %68, %64, %71 : vector<16x1xi1>, vector<16x1xf32>
    %73 = arith.addf %70, %72 : vector<16x1xf32>
    %cst_30 = arith.constant 2.000000e+00 : f32
    %74 = vector.broadcast %cst_30 : f32 to vector<16x1xf32>
    %75 = arith.cmpf oeq, %28, %74 : vector<16x1xf32>
    %cst_31 = arith.constant 2.000000e+00 : f32
    %76 = vector.broadcast %cst_31 : f32 to vector<16x1xf32>
    %77 = arith.cmpf oeq, %40, %76 : vector<16x1xf32>
    %cst_32 = arith.constant 0.000000e+00 : f32
    %78 = vector.broadcast %cst_32 : f32 to vector<16x1xf32>
    %79 = arith.select %75, %56, %78 : vector<16x1xi1>, vector<16x1xf32>
    %cst_33 = arith.constant 0.000000e+00 : f32
    %80 = vector.broadcast %cst_33 : f32 to vector<16x1xf32>
    %81 = arith.select %77, %64, %80 : vector<16x1xi1>, vector<16x1xf32>
    %82 = arith.addf %79, %81 : vector<16x1xf32>
    %cst_34 = arith.constant 3.000000e+00 : f32
    %83 = vector.broadcast %cst_34 : f32 to vector<16x1xf32>
    %84 = arith.cmpf oeq, %28, %83 : vector<16x1xf32>
    %cst_35 = arith.constant 3.000000e+00 : f32
    %85 = vector.broadcast %cst_35 : f32 to vector<16x1xf32>
    %86 = arith.cmpf oeq, %40, %85 : vector<16x1xf32>
    %cst_36 = arith.constant 0.000000e+00 : f32
    %87 = vector.broadcast %cst_36 : f32 to vector<16x1xf32>
    %88 = arith.select %84, %56, %87 : vector<16x1xi1>, vector<16x1xf32>
    %cst_37 = arith.constant 0.000000e+00 : f32
    %89 = vector.broadcast %cst_37 : f32 to vector<16x1xf32>
    %90 = arith.select %86, %64, %89 : vector<16x1xi1>, vector<16x1xf32>
    %91 = arith.addf %88, %90 : vector<16x1xf32>
    %cst_38 = arith.constant 4.000000e+00 : f32
    %92 = vector.broadcast %cst_38 : f32 to vector<16x1xf32>
    %93 = arith.cmpf oge, %28, %92 : vector<16x1xf32>
    %cst_39 = arith.constant 4.000000e+00 : f32
    %94 = vector.broadcast %cst_39 : f32 to vector<16x1xf32>
    %95 = arith.cmpf oge, %40, %94 : vector<16x1xf32>
    %cst_40 = arith.constant 0.000000e+00 : f32
    %96 = vector.broadcast %cst_40 : f32 to vector<16x1xf32>
    %97 = arith.select %93, %56, %96 : vector<16x1xi1>, vector<16x1xf32>
    %cst_41 = arith.constant 0.000000e+00 : f32
    %98 = vector.broadcast %cst_41 : f32 to vector<16x1xf32>
    %99 = arith.select %95, %64, %98 : vector<16x1xi1>, vector<16x1xf32>
    %100 = arith.addf %97, %99 : vector<16x1xf32>
    %101 = arith.negf %4 : vector<16x256xf32>
    %102 = math.exp %101 : vector<16x256xf32>
    %cst_42 = arith.constant 1.000000e+00 : f32
    %103 = vector.broadcast %cst_42 : f32 to vector<16x256xf32>
    %104 = arith.addf %103, %102 : vector<16x256xf32>
    %105 = arith.divf %103, %104 : vector<16x256xf32>
    %106 = arith.mulf %4, %105 : vector<16x256xf32>
    %107 = arith.mulf %106, %5 : vector<16x256xf32>
    %108 = arith.truncf %107 : vector<16x256xf32> to vector<16x256xbf16>
    %c0_43 = arith.constant 0 : index
    %c0_44 = arith.constant 0 : index
    %109 = vector.load %arg4[%c0_43, %c0_44] : memref<256x128xbf16, #tpu.memory_space<vmem>>, vector<256x128xbf16>
    %cst_45 = arith.constant dense<0.000000e+00> : vector<16x128xf32>
    %110 = tpu.matmul %108, %109, %cst_45 {dimension_numbers = #tpu.dot_dimension_numbers<[1], [0], [0], [1], [0, 0, 1, 1], [], []>} : vector<16x256xbf16>, vector<256x128xbf16>, vector<16x128xf32> -> vector<16x128xf32>
    %111 = vector.extract_strided_slice %7 {offsets = [0, 0], sizes = [16, 1], strides = [1, 1]} : vector<16x4xf32> to vector<16x1xf32>
    %112 = vector.extract_strided_slice %7 {offsets = [0, 1], sizes = [16, 1], strides = [1, 1]} : vector<16x4xf32> to vector<16x1xf32>
    %113 = arith.subf %111, %112 : vector<16x1xf32>
    %114 = arith.negf %113 : vector<16x1xf32>
    %115 = math.exp %114 : vector<16x1xf32>
    %cst_46 = arith.constant 1.000000e+00 : f32
    %116 = vector.broadcast %cst_46 : f32 to vector<16x1xf32>
    %117 = arith.addf %116, %115 : vector<16x1xf32>
    %118 = arith.divf %116, %117 : vector<16x1xf32>
    %119 = vector.extract_strided_slice %7 {offsets = [0, 2], sizes = [16, 1], strides = [1, 1]} : vector<16x4xf32> to vector<16x1xf32>
    %120 = vector.extract_strided_slice %7 {offsets = [0, 3], sizes = [16, 1], strides = [1, 1]} : vector<16x4xf32> to vector<16x1xf32>
    %121 = arith.subf %119, %120 : vector<16x1xf32>
    %122 = arith.negf %121 : vector<16x1xf32>
    %123 = math.exp %122 : vector<16x1xf32>
    %cst_47 = arith.constant 1.000000e+00 : f32
    %124 = vector.broadcast %cst_47 : f32 to vector<16x1xf32>
    %125 = arith.addf %124, %123 : vector<16x1xf32>
    %126 = arith.divf %124, %125 : vector<16x1xf32>
    %c0_48 = arith.constant 0 : index
    %c0_49 = arith.constant 0 : index
    %127 = vector.load %arg5[%c0_48, %c0_49] : memref<2x128xf32, #tpu.memory_space<vmem>>, vector<2x128xf32>
    %128 = arith.mulf %82, %118 : vector<16x1xf32>
    %129 = arith.addf %73, %128 : vector<16x1xf32>
    %130 = arith.mulf %91, %126 : vector<16x1xf32>
    %131 = arith.addf %129, %130 : vector<16x1xf32>
    %cst_50 = arith.constant 1.000000e+00 : f32
    %132 = vector.broadcast %cst_50 : f32 to vector<16x1xf32>
    %133 = arith.subf %132, %118 : vector<16x1xf32>
    %134 = arith.mulf %82, %133 : vector<16x1xf32>
    %cst_51 = arith.constant 1.000000e+00 : f32
    %135 = vector.broadcast %cst_51 : f32 to vector<16x1xf32>
    %136 = arith.subf %135, %126 : vector<16x1xf32>
    %137 = arith.mulf %91, %136 : vector<16x1xf32>
    %138 = vector.broadcast %131 : vector<16x1xf32> to vector<16x128xf32>
    %139 = arith.mulf %138, %1 : vector<16x128xf32>
    %140 = vector.broadcast %100 : vector<16x1xf32> to vector<16x128xf32>
    %141 = arith.mulf %140, %110 : vector<16x128xf32>
    %142 = arith.addf %139, %141 : vector<16x128xf32>
    %143 = vector.extract_strided_slice %127 {offsets = [0, 0], sizes = [1, 128], strides = [1, 1]} : vector<2x128xf32> to vector<1x128xf32>
    %144 = vector.broadcast %134 : vector<16x1xf32> to vector<16x128xf32>
    %145 = vector.broadcast %143 : vector<1x128xf32> to vector<16x128xf32>
    %146 = arith.mulf %144, %145 : vector<16x128xf32>
    %147 = arith.addf %142, %146 : vector<16x128xf32>
    %148 = vector.extract_strided_slice %127 {offsets = [1, 0], sizes = [1, 128], strides = [1, 1]} : vector<2x128xf32> to vector<1x128xf32>
    %149 = vector.broadcast %137 : vector<16x1xf32> to vector<16x128xf32>
    %150 = vector.broadcast %148 : vector<1x128xf32> to vector<16x128xf32>
    %151 = arith.mulf %149, %150 : vector<16x128xf32>
    %152 = arith.addf %147, %151 : vector<16x128xf32>
    %c0_52 = arith.constant 0 : index
    %c0_53 = arith.constant 0 : index
    %153 = vector.load %arg6[%c0_52, %c0_53] : memref<16x128xf32, #tpu.memory_space<vmem>>, vector<16x128xf32>
    tpu.vector_store %arg6[%c0_52, %c0_53], %152 {strides = array<i32>} : memref<16x128xf32, #tpu.memory_space<vmem>>, vector<16x128xf32>,
    return
  }
  func.func @transform_0(%arg0: i32) -> (i32, i32) {
    %c0_i32 = arith.constant 0 : i32
    %c0_i32_0 = arith.constant 0 : i32
    return %arg0, %c0_i32 : i32, i32
  }
  func.func @transform_1(%arg0: i32) -> (i32, i32) {
    %c0_i32 = arith.constant 0 : i32
    %c0_i32_0 = arith.constant 0 : i32
    %c0_i32_1 = arith.constant 0 : i32
    return %c0_i32, %c0_i32_0 : i32, i32
  }
  func.func @transform_2(%arg0: i32) -> (i32, i32) {
    %c0_i32 = arith.constant 0 : i32
    %c0_i32_0 = arith.constant 0 : i32
    %c0_i32_1 = arith.constant 0 : i32
    return %c0_i32, %c0_i32_0 : i32, i32
  }
  func.func @transform_3(%arg0: i32) -> (i32, i32) {
    %c0_i32 = arith.constant 0 : i32
    %c0_i32_0 = arith.constant 0 : i32
    %c0_i32_1 = arith.constant 0 : i32
    return %c0_i32, %c0_i32_0 : i32, i32
  }
  func.func @transform_4(%arg0: i32) -> (i32, i32) {
    %c0_i32 = arith.constant 0 : i32
    %c0_i32_0 = arith.constant 0 : i32
    %c0_i32_1 = arith.constant 0 : i32
    return %c0_i32, %c0_i32_0 : i32, i32
  }
  func.func @transform_5(%arg0: i32) -> (i32, i32) {
    %c0_i32 = arith.constant 0 : i32
    %c0_i32_0 = arith.constant 0 : i32
    return %arg0, %c0_i32 : i32, i32
  }
  func.func @transform_6(%arg0: i32) -> (i32, i32) {
    %c0_i32 = arith.constant 0 : i32
    %c0_i32_0 = arith.constant 0 : i32
    return %arg0, %c0_i32 : i32, i32
  }
}

</mosaic_0001>

<llo_original>
// kernel: tpu_custom_call.1
$region0: #{tpu_custom_call.1}
  #allocation0 [shape = 'u32[]', space=smem, size = 0x4, offset = 0x4, fixed_abs, tag = 'smem constant byte address 0x4 - core index']
  #allocation1 [shape = 'u32[144,128]{1,0:T(1,128)}', space=vmem, size = 0x12000, scoped, tag = 'internal scratch']
  %s0 = inlined_call_operand.hbm [shape: bf16[16,128], index: 0, kind: input, shape index: {}]
  %s1 = inlined_call_operand.hbm [shape: bf16[128,640], index: 1, kind: input, shape index: {}]
  %s2 = inlined_call_operand.hbm [shape: bf16[64,128], index: 2, kind: input, shape index: {}]
  %s3 = inlined_call_operand.hbm [shape: bf16[256,128], index: 3, kind: input, shape index: {}]
  %s4 = inlined_call_operand.vmem [shape: f32[2,128], index: 4, kind: input, shape index: {}]
  %s5 = inlined_call_operand.hbm [shape: f32[16,128], index: 5, kind: output, shape index: {0}]
  %s6 = inlined_call_operand.hbm [shape: bf16[16,128], index: 6, kind: output, shape index: {1}]
  %7 = xla_tuple %s5, %s6
  %s8 = sld [smem:[#allocation0]]
  $region54: #{tpu_custom_call.1} parent=0
    _
  %s10 = ssub.s32 1, %s8
  %s11 = scalar_select 0, %s10, %s8
  $region1: #{tpu_custom_call.1} parent=0
    #allocation2 [shape = 'u8[4096]{0}', space=vmem, size = 0x1000, scoped, tag = 'input window, operand 0, single buffered']
    #allocation3 [shape = 's32[1]{0}', space=sflag, size = 0x4, scoped, tag = 'scoped memory for tpu_custom_call.1']
    #allocation4 [shape = 's32[1]{0}', space=sflag, size = 0x4, scoped, tag = 'scoped memory for tpu_custom_call.1']
    #allocation5 [shape = 'u8[163840]{0}', space=vmem, size = 0x28000, scoped, tag = 'input window, operand 1, single buffered']
    #allocation6 [shape = 's32[1]{0}', space=sflag, size = 0x4, scoped, tag = 'scoped memory for tpu_custom_call.1']
    #allocation7 [shape = 'u8[16384]{0}', space=vmem, size = 0x4000, scoped, tag = 'input window, operand 2, single buffered']
    #allocation8 [shape = 'u8[65536]{0}', space=vmem, size = 0x10000, scoped, tag = 'input window, operand 3, single buffered']
    #allocation9 [shape = 's32[1]{0}', space=sflag, size = 0x4, scoped, tag = 'scoped memory for tpu_custom_call.1']
    #allocation10 [shape = 'u8[8192]{0}', space=vmem, size = 0x2000, scoped, tag = 'output window, operand 0, single buffered']
    #allocation11 [shape = 'u8[4096]{0}', space=vmem, size = 0x1000, scoped, tag = 'output window, operand 1, single buffered']
    #allocation12 [shape = 's32[1]{0}', space=sflag, size = 0x4, scoped, tag = 'scoped memory for tpu_custom_call.1']
    %12 = vsyncpa [#allocation3], 0
    %13 = vsyncpa [#allocation6], 0
    %14 = vsyncpa [#allocation9], 0
    %15 = vsyncpa [#allocation4], 0
    %16 = vsyncpa [#allocation12], 0
    // Predicated region
    $region2: #{tpu_custom_call.1} parent=1 // pred_check
      _
    $region3: #{tpu_custom_call.1} parent=1 // pred_check_branch
      %18 = sbr.rel (0) target = $region5
    $region4: #{tpu_custom_call.1} parent=1 // pred_region
      %s20 = ssub.s32 128, 128
      %21 = vsyncadd [#allocation3], %s20
      %s22 = sshll.u32 [#allocation2], 4
      %s23 = int_to_ptr.vmem [resolvable:$true] %s22
      %28 = dma.hbm_to_vmem [thread:$0]  %s0, 128, %s23, [#allocation3], 64, 64, 4
    $region5: #{tpu_custom_call.1} parent=1 // pred_fallthru
      _
    // Predicated region
    $region6: #{tpu_custom_call.1} parent=1 // pred_check
      _
    $region7: #{tpu_custom_call.1} parent=1 // pred_check_branch
      %30 = sbr.rel (0) target = $region9
    $region8: #{tpu_custom_call.1} parent=1 // pred_region
      %s32 = ssub.s32 5120, 5120
      %33 = vsyncadd [#allocation6], %s32
      %s34 = sshll.u32 [#allocation5], 4
      %s35 = int_to_ptr.vmem [resolvable:$true] %s34
      %40 = dma.hbm_to_vmem [thread:$0]  %s1, 5120, %s35, [#allocation6], 320, 320, 20
    $region9: #{tpu_custom_call.1} parent=1 // pred_fallthru
      _
    // Predicated region
    $region10: #{tpu_custom_call.1} parent=1 // pred_check
      _
    $region11: #{tpu_custom_call.1} parent=1 // pred_check_branch
      %42 = sbr.rel (0) target = $region13
    $region12: #{tpu_custom_call.1} parent=1 // pred_region
      %s44 = ssub.s32 512, 512
      %45 = vsyncadd [#allocation6], %s44
      %s46 = sshll.u32 [#allocation7], 4
      %s47 = int_to_ptr.vmem [resolvable:$true] %s46
      %52 = dma.hbm_to_vmem [thread:$0]  %s2, 512, %s47, [#allocation6], 64, 64, 4
    $region13: #{tpu_custom_call.1} parent=1 // pred_fallthru
      _
    // Predicated region
    $region14: #{tpu_custom_call.1} parent=1 // pred_check
      _
    $region15: #{tpu_custom_call.1} parent=1 // pred_check_branch
      %54 = sbr.rel (0) target = $region17
    $region16: #{tpu_custom_call.1} parent=1 // pred_region
      %s56 = ssub.s32 2048, 2048
      %57 = vsyncadd [#allocation9], %s56
      %s58 = sshll.u32 [#allocation8], 4
      %s59 = int_to_ptr.vmem [resolvable:$true] %s58
      %64 = dma.hbm_to_vmem [thread:$0]  %s3, 2048, %s59, [#allocation9], 64, 64, 4
    $region17: #{tpu_custom_call.1} parent=1 // pred_fallthru
      _
    // Predicated region
    $region18: #{tpu_custom_call.1} parent=1 // pred_check
      _
    $region19: #{tpu_custom_call.1} parent=1 // pred_check_branch
      %66 = sbr.rel (0) target = $region21
    $region20: #{tpu_custom_call.1} parent=1 // pred_region
      _
    $region21: #{tpu_custom_call.1} parent=1 // pred_fallthru
      _
    // Predicated region
    $region22: #{tpu_custom_call.1} parent=1 // pred_check
      _
    $region23: #{tpu_custom_call.1} parent=1 // pred_check_branch
      %68 = sbr.rel (0) target = $region25
    $region24: #{tpu_custom_call.1} parent=1 // pred_region
      %69 = dma.done [#allocation3], 128
    $region25: #{tpu_custom_call.1} parent=1 // pred_fallthru
      _
    // Predicated region
    $region26: #{tpu_custom_call.1} parent=1 // pred_check
      _
    $region27: #{tpu_custom_call.1} parent=1 // pred_check_branch
      %71 = sbr.rel (0) target = $region29
    $region28: #{tpu_custom_call.1} parent=1 // pred_region
      %72 = dma.done [#allocation6], 5120
    $region29: #{tpu_custom_call.1} parent=1 // pred_fallthru
      _
    // Predicated region
    $region30: #{tpu_custom_call.1} parent=1 // pred_check
      _
    $region31: #{tpu_custom_call.1} parent=1 // pred_check_branch
      %74 = sbr.rel (0) target = $region33
    $region32: #{tpu_custom_call.1} parent=1 // pred_region
      %75 = dma.done [#allocation6], 512
    $region33: #{tpu_custom_call.1} parent=1 // pred_fallthru
      _
    // Predicated region
    $region34: #{tpu_custom_call.1} parent=1 // pred_check
      _
    $region35: #{tpu_custom_call.1} parent=1 // pred_check_branch
      %77 = sbr.rel (0) target = $region37
    $region36: #{tpu_custom_call.1} parent=1 // pred_region
      %78 = dma.done [#allocation9], 2048
    $region37: #{tpu_custom_call.1} parent=1 // pred_fallthru
      _
    %v80 = vld [vmem:[#allocation2] sm:$0xf]
    %v81 = vld [vmem:[#allocation2 + $0x4] sm:$0xf]
    %v82 = vunpack.c.l.bf16 %v80
    %v83 = vunpack.c.l.bf16 %v81
    %v84 = vld [vmem:[#allocation5] sm:$0xff]
    %v85 = vld [vmem:[#allocation5 + $0x8] sm:$0xff]
    %v86 = vld [vmem:[#allocation5 + $0x10] sm:$0xf]
    %v87 = vld [vmem:[#allocation5 + $0x14] sm:$0xff]
    %v88 = vld [vmem:[#allocation5 + $0x1c] sm:$0xff]
    %v89 = vld [vmem:[#allocation5 + $0x24] sm:$0xf]
    %v90 = vld [vmem:[#allocation5 + $0x28] sm:$0xff]
    %v91 = vld [vmem:[#allocation5 + $0x30] sm:$0xff]
    %v92 = vld [vmem:[#allocation5 + $0x38] sm:$0xf]
    %v93 = vld [vmem:[#allocation5 + $0x3c] sm:$0xff]
    %v94 = vld [vmem:[#allocation5 + $0x44] sm:$0xff]
    %v95 = vld [vmem:[#allocation5 + $0x4c] sm:$0xf]
    %v96 = vld [vmem:[#allocation5 + $0x50] sm:$0xff]
    %v97 = vld [vmem:[#allocation5 + $0x58] sm:$0xff]
    %v98 = vld [vmem:[#allocation5 + $0x60] sm:$0xf]
    %v99 = vld [vmem:[#allocation5 + $0x64] sm:$0xff]
    %v100 = vld [vmem:[#allocation5 + $0x6c] sm:$0xff]
    %v101 = vld [vmem:[#allocation5 + $0x74] sm:$0xf]
    %v102 = vld [vmem:[#allocation5 + $0x78] sm:$0xff]
    %v103 = vld [vmem:[#allocation5 + $0x80] sm:$0xff]
    %v104 = vld [vmem:[#allocation5 + $0x88] sm:$0xf]
    %v105 = vld [vmem:[#allocation5 + $0x8c] sm:$0xff]
    %v106 = vld [vmem:[#allocation5 + $0x94] sm:$0xff]
    %v107 = vld [vmem:[#allocation5 + $0x9c] sm:$0xf]
    %v108 = vld [vmem:[#allocation5 + $0xa0] sm:$0xff]
    %v109 = vld [vmem:[#allocation5 + $0xa8] sm:$0xff]
    %v110 = vld [vmem:[#allocation5 + $0xb0] sm:$0xf]
    %v111 = vld [vmem:[#allocation5 + $0xb4] sm:$0xff]
    %v112 = vld [vmem:[#allocation5 + $0xbc] sm:$0xff]
    %v113 = vld [vmem:[#allocation5 + $0xc4] sm:$0xf]
    %v114 = vld [vmem:[#allocation5 + $0xc8] sm:$0xff]
    %v115 = vld [vmem:[#allocation5 + $0xd0] sm:$0xff]
    %v116 = vld [vmem:[#allocation5 + $0xd8] sm:$0xf]
    %v117 = vld [vmem:[#allocation5 + $0xdc] sm:$0xff]
    %v118 = vld [vmem:[#allocation5 + $0xe4] sm:$0xff]
    %v119 = vld [vmem:[#allocation5 + $0xec] sm:$0xf]
    %v120 = vld [vmem:[#allocation5 + $0xf0] sm:$0xff]
    %v121 = vld [vmem:[#allocation5 + $0xf8] sm:$0xff]
    %v122 = vld [vmem:[#allocation5 + $0x100] sm:$0xf]
    %v123 = vld [vmem:[#allocation5 + $0x104] sm:$0xff]
    %v124 = vld [vmem:[#allocation5 + $0x10c] sm:$0xff]
    %v125 = vld [vmem:[#allocation5 + $0x114] sm:$0xf]
    %v126 = vld [vmem:[#allocation5 + $0x118] sm:$0xff]
    %v127 = vld [vmem:[#allocation5 + $0x120] sm:$0xff]
    %v128 = vld [vmem:[#allocation5 + $0x128] sm:$0xf]
    %v129 = vld [vmem:[#allocation5 + $0x12c] sm:$0xff]
    %v130 = vld [vmem:[#allocation5 + $0x134] sm:$0xff]
    %v131 = vld [vmem:[#allocation5 + $0x13c] sm:$0xf]
    %v134 = vunpack.c.l.b16 %v80
    %v135 = vunpack.c.l.b16 %v81
    %v136 = vpack.c.b16 %v135, %v134
    %v186 = vunpack.c.l.b16 %v84
    %v187 = vunpack.c.h.b16 %v84
    %v188 = vunpack.c.l.b16 %v85
    %v189 = vunpack.c.h.b16 %v85
    %v190 = vunpack.c.l.b16 %v86
    %v191 = vunpack.c.l.b16 %v87
    %v192 = vunpack.c.h.b16 %v87
    %v193 = vunpack.c.l.b16 %v88
    %v194 = vunpack.c.h.b16 %v88
    %v195 = vunpack.c.l.b16 %v89
    %v196 = vunpack.c.l.b16 %v90
    %v197 = vunpack.c.h.b16 %v90
    %v198 = vunpack.c.l.b16 %v91
    %v199 = vunpack.c.h.b16 %v91
    %v200 = vunpack.c.l.b16 %v92
    %v201 = vunpack.c.l.b16 %v93
    %v202 = vunpack.c.h.b16 %v93
    %v203 = vunpack.c.l.b16 %v94
    %v204 = vunpack.c.h.b16 %v94
    %v205 = vunpack.c.l.b16 %v95
    %v206 = vunpack.c.l.b16 %v96
    %v207 = vunpack.c.h.b16 %v96
    %v208 = vunpack.c.l.b16 %v97
    %v209 = vunpack.c.h.b16 %v97
    %v210 = vunpack.c.l.b16 %v98
    %v211 = vunpack.c.l.b16 %v99
    %v212 = vunpack.c.h.b16 %v99
    %v213 = vunpack.c.l.b16 %v100
    %v214 = vunpack.c.h.b16 %v100
    %v215 = vunpack.c.l.b16 %v101
    %v216 = vunpack.c.l.b16 %v102
    %v217 = vunpack.c.h.b16 %v102
    %v218 = vunpack.c.l.b16 %v103
    %v219 = vunpack.c.h.b16 %v103
    %v220 = vunpack.c.l.b16 %v104
    %v221 = vunpack.c.l.b16 %v105
    %v222 = vunpack.c.h.b16 %v105
    %v223 = vunpack.c.l.b16 %v106
    %v224 = vunpack.c.h.b16 %v106
    %v225 = vunpack.c.l.b16 %v107
    %v226 = vunpack.c.l.b16 %v108
    %v227 = vunpack.c.h.b16 %v108
    %v228 = vunpack.c.l.b16 %v109
    %v229 = vunpack.c.h.b16 %v109
    %v230 = vunpack.c.l.b16 %v110
    %v231 = vunpack.c.l.b16 %v111
    %v232 = vunpack.c.h.b16 %v111
    %v233 = vunpack.c.l.b16 %v112
    %v234 = vunpack.c.h.b16 %v112
    %v235 = vunpack.c.l.b16 %v113
    %v236 = vunpack.c.l.b16 %v114
    %v237 = vunpack.c.h.b16 %v114
    %v238 = vunpack.c.l.b16 %v115
    %v239 = vunpack.c.h.b16 %v115
    %v240 = vunpack.c.l.b16 %v116
    %v241 = vunpack.c.l.b16 %v117
    %v242 = vunpack.c.h.b16 %v117
    %v243 = vunpack.c.l.b16 %v118
    %v244 = vunpack.c.h.b16 %v118
    %v245 = vunpack.c.l.b16 %v119
    %v246 = vunpack.c.l.b16 %v120
    %v247 = vunpack.c.h.b16 %v120
    %v248 = vunpack.c.l.b16 %v121
    %v249 = vunpack.c.h.b16 %v121
    %v250 = vunpack.c.l.b16 %v122
    %v251 = vunpack.c.l.b16 %v123
    %v252 = vunpack.c.h.b16 %v123
    %v253 = vunpack.c.l.b16 %v124
    %v254 = vunpack.c.h.b16 %v124
    %v255 = vunpack.c.l.b16 %v125
    %v256 = vunpack.c.l.b16 %v126
    %v257 = vunpack.c.h.b16 %v126
    %v258 = vunpack.c.l.b16 %v127
    %v259 = vunpack.c.h.b16 %v127
    %v260 = vunpack.c.l.b16 %v128
    %v261 = vunpack.c.l.b16 %v129
    %v262 = vunpack.c.h.b16 %v129
    %v263 = vunpack.c.l.b16 %v130
    %v264 = vunpack.c.h.b16 %v130
    %v265 = vunpack.c.l.b16 %v131
    %v266 = vpack.c.b16 %v191, %v186
    %v267 = vpack.c.b16 %v192, %v187
    %v268 = vpack.c.b16 %v193, %v188
    %v269 = vpack.c.b16 %v194, %v189
    %v270 = vpack.c.b16 %v195, %v190
    %v271 = vpack.c.b16 %v201, %v196
    %v272 = vpack.c.b16 %v202, %v197
    %v273 = vpack.c.b16 %v203, %v198
    %v274 = vpack.c.b16 %v204, %v199
    %v275 = vpack.c.b16 %v205, %v200
    %v276 = vpack.c.b16 %v211, %v206
    %v277 = vpack.c.b16 %v212, %v207
    %v278 = vpack.c.b16 %v213, %v208
    %v279 = vpack.c.b16 %v214, %v209
    %v280 = vpack.c.b16 %v215, %v210
    %v281 = vpack.c.b16 %v221, %v216
    %v282 = vpack.c.b16 %v222, %v217
    %v283 = vpack.c.b16 %v223, %v218
    %v284 = vpack.c.b16 %v224, %v219
    %v285 = vpack.c.b16 %v225, %v220
    %v286 = vpack.c.b16 %v231, %v226
    %v287 = vpack.c.b16 %v232, %v227
    %v288 = vpack.c.b16 %v233, %v228
    %v289 = vpack.c.b16 %v234, %v229
    %v290 = vpack.c.b16 %v235, %v230
    %v291 = vpack.c.b16 %v241, %v236
    %v292 = vpack.c.b16 %v242, %v237
    %v293 = vpack.c.b16 %v243, %v238
    %v294 = vpack.c.b16 %v244, %v239
    %v295 = vpack.c.b16 %v245, %v240
    %v296 = vpack.c.b16 %v251, %v246
    %v297 = vpack.c.b16 %v252, %v247
    %v298 = vpack.c.b16 %v253, %v248
    %v299 = vpack.c.b16 %v254, %v249
    %v300 = vpack.c.b16 %v255, %v250
    %v301 = vpack.c.b16 %v261, %v256
    %v302 = vpack.c.b16 %v262, %v257
    %v303 = vpack.c.b16 %v263, %v258
    %v304 = vpack.c.b16 %v264, %v259
    %v305 = vpack.c.b16 %v265, %v260
    %346 = vmatprep.subr.bf16.mxu0 %v267
    %347 = vmatpush1.bf16.msra.mxu0 %v266
    %348 = vmatprep.subr.bf16.mxu0 %v272
    %349 = vmatpush1.bf16.msra.mxu0 %v271
    %350 = vmatprep.subr.bf16.mxu0 %v277
    %351 = vmatpush1.bf16.msra.mxu0 %v276
    %352 = vmatprep.subr.bf16.mxu0 %v282
    %353 = vmatpush1.bf16.msra.mxu0 %v281
    %354 = vmatprep.subr.bf16.mxu0 %v287
    %355 = vmatpush1.bf16.msra.mxu0 %v286
    %356 = vmatprep.subr.bf16.mxu0 %v292
    %357 = vmatpush1.bf16.msra.mxu0 %v291
    %358 = vmatprep.subr.bf16.mxu0 %v297
    %359 = vmatpush1.bf16.msra.mxu0 %v296
    %360 = vmatprep.subr.bf16.mxu0 %v302
    %361 = vmatpush1.bf16.msra.mxu0 %v301
    %362 = vmatprep.subr.bf16.mxu0 0
    %363 = vmatpush1.bf16.msra.mxu0 0
    %364 = vmatprep.subr.bf16.mxu0 0
    %365 = vmatpush1.bf16.msra.mxu0 0
    %366 = vmatprep.subr.bf16.mxu0 0
    %367 = vmatpush1.bf16.msra.mxu0 0
    %368 = vmatprep.subr.bf16.mxu0 0
    %369 = vmatpush1.bf16.msra.mxu0 0
    %370 = vmatprep.subr.bf16.mxu0 0
    %371 = vmatpush1.bf16.msra.mxu0 0
    %372 = vmatprep.subr.bf16.mxu0 0
    %373 = vmatpush1.bf16.msra.mxu0 0
    %374 = vmatprep.subr.bf16.mxu0 0
    %375 = vmatpush1.bf16.msra.mxu0 0
    %376 = vmatprep.subr.bf16.mxu0 0
    %377 = vmatpush1.bf16.msra.mxu0 0
    %378 = vmatprep.mubr.bf16.mxu0 0
    %379 = vmatmul.mubr.bf16.gmra.mrb[0].mxu0 %v136
    %v380 = vpop.f32.mrb[0].mxu0
    %v381 = vadd.f32 0.0, %v380
    %v382 = vpop.f32.mrb[0].mxu0
    %v383 = vadd.f32 0.0, %v382
    %v384 = vpop.f32.mrb[0].mxu0
    %v385 = vadd.f32 0.0, %v384
    %v386 = vpop.f32.mrb[0].mxu0
    %v387 = vadd.f32 0.0, %v386
    %388 = vdwg.mxu0
    %389 = vmatprep.subr.bf16.mxu0 %v269
    %390 = vmatpush1.bf16.msra.mxu0 %v268
    %391 = vmatprep.subr.bf16.mxu0 %v274
    %392 = vmatpush1.bf16.msra.mxu0 %v273
    %393 = vmatprep.subr.bf16.mxu0 %v279
    %394 = vmatpush1.bf16.msra.mxu0 %v278
    %395 = vmatprep.subr.bf16.mxu0 %v284
    %396 = vmatpush1.bf16.msra.mxu0 %v283
    %397 = vmatprep.subr.bf16.mxu0 %v289
    %398 = vmatpush1.bf16.msra.mxu0 %v288
    %399 = vmatprep.subr.bf16.mxu0 %v294
    %400 = vmatpush1.bf16.msra.mxu0 %v293
    %401 = vmatprep.subr.bf16.mxu0 %v299
    %402 = vmatpush1.bf16.msra.mxu0 %v298
    %403 = vmatprep.subr.bf16.mxu0 %v304
    %404 = vmatpush1.bf16.msra.mxu0 %v303
    %405 = vmatprep.subr.bf16.mxu0 0
    %406 = vmatpush1.bf16.msra.mxu0 0
    %407 = vmatprep.subr.bf16.mxu0 0
    %408 = vmatpush1.bf16.msra.mxu0 0
    %409 = vmatprep.subr.bf16.mxu0 0
    %410 = vmatpush1.bf16.msra.mxu0 0
    %411 = vmatprep.subr.bf16.mxu0 0
    %412 = vmatpush1.bf16.msra.mxu0 0
    %413 = vmatprep.subr.bf16.mxu0 0
    %414 = vmatpush1.bf16.msra.mxu0 0
    %415 = vmatprep.subr.bf16.mxu0 0
    %416 = vmatpush1.bf16.msra.mxu0 0
    %417 = vmatprep.subr.bf16.mxu0 0
    %418 = vmatpush1.bf16.msra.mxu0 0
    %419 = vmatprep.subr.bf16.mxu0 0
    %420 = vmatpush1.bf16.msra.mxu0 0
    %421 = vmatprep.mubr.bf16.mxu0 0
    %422 = vmatmul.mubr.bf16.gmra.mrb[0].mxu0 %v136
    %v423 = vpop.f32.mrb[0].mxu0
    %v424 = vadd.f32 0.0, %v423
    %v425 = vpop.f32.mrb[0].mxu0
    %v426 = vadd.f32 0.0, %v425
    %v427 = vpop.f32.mrb[0].mxu0
    %v428 = vadd.f32 0.0, %v427
    %v429 = vpop.f32.mrb[0].mxu0
    %v430 = vadd.f32 0.0, %v429
    %431 = vdwg.mxu0
    %432 = vmatprep.subr.bf16.mxu0 0
    %433 = vmatpush1.bf16.msra.mxu0 %v270
    %434 = vmatprep.subr.bf16.mxu0 0
    %435 = vmatpush1.bf16.msra.mxu0 %v275
    %436 = vmatprep.subr.bf16.mxu0 0
    %437 = vmatpush1.bf16.msra.mxu0 %v280
    %438 = vmatprep.subr.bf16.mxu0 0
    %439 = vmatpush1.bf16.msra.mxu0 %v285
    %440 = vmatprep.subr.bf16.mxu0 0
    %441 = vmatpush1.bf16.msra.mxu0 %v290
    %442 = vmatprep.subr.bf16.mxu0 0
    %443 = vmatpush1.bf16.msra.mxu0 %v295
    %444 = vmatprep.subr.bf16.mxu0 0
    %445 = vmatpush1.bf16.msra.mxu0 %v300
    %446 = vmatprep.subr.bf16.mxu0 0
    %447 = vmatpush1.bf16.msra.mxu0 %v305
    %448 = vmatprep.subr.bf16.mxu0 0
    %449 = vmatpush1.bf16.msra.mxu0 0
    %450 = vmatprep.subr.bf16.mxu0 0
    %451 = vmatpush1.bf16.msra.mxu0 0
    %452 = vmatprep.subr.bf16.mxu0 0
    %453 = vmatpush1.bf16.msra.mxu0 0
    %454 = vmatprep.subr.bf16.mxu0 0
    %455 = vmatpush1.bf16.msra.mxu0 0
    %456 = vmatprep.subr.bf16.mxu0 0
    %457 = vmatpush1.bf16.msra.mxu0 0
    %458 = vmatprep.subr.bf16.mxu0 0
    %459 = vmatpush1.bf16.msra.mxu0 0
    %460 = vmatprep.subr.bf16.mxu0 0
    %461 = vmatpush1.bf16.msra.mxu0 0
    %462 = vmatprep.subr.bf16.mxu0 0
    %463 = vmatpush1.bf16.msra.mxu0 0
    %464 = vmatprep.mubr.bf16.mxu0 0
    %465 = vmatmul.mubr.bf16.gmra.mrb[0].mxu0 %v136
    %v466 = vpop.f32.mrb[0].mxu0
    %v467 = vadd.f32 0.0, %v466
    %v468 = vpop.f32.mrb[0].mxu0
    %v469 = vpop.f32.mrb[0].mxu0
    %v470 = vadd.f32 0.0, %v469
    %v471 = vpop.f32.mrb[0].mxu0
    %472 = vdwg.mxu0
    %v473 = vtanh.pop %v467
    %v474 = vtanh.pop %v470
    %v475 = vpack.c.bf16 %v474, %v473
    %v476 = vld [vmem:[#allocation7] sm:$0xf]
    %v477 = vld [vmem:[#allocation7 + $0x4] sm:$0xf]
    %v478 = vld [vmem:[#allocation7 + $0x8] sm:$0xf]
    %v479 = vld [vmem:[#allocation7 + $0xc] sm:$0xf]
    %v480 = vld [vmem:[#allocation7 + $0x10] sm:$0xf]
    %v481 = vld [vmem:[#allocation7 + $0x14] sm:$0xf]
    %v482 = vld [vmem:[#allocation7 + $0x18] sm:$0xf]
    %v483 = vld [vmem:[#allocation7 + $0x1c] sm:$0xf]
    %v492 = vunpack.c.l.b16 %v476
    %v493 = vunpack.c.l.b16 %v477
    %v494 = vunpack.c.l.b16 %v478
    %v495 = vunpack.c.l.b16 %v479
    %v496 = vunpack.c.l.b16 %v480
    %v497 = vunpack.c.l.b16 %v481
    %v498 = vunpack.c.l.b16 %v482
    %v499 = vunpack.c.l.b16 %v483
    %v500 = vpack.c.b16 %v493, %v492
    %v501 = vpack.c.b16 %v495, %v494
    %v502 = vpack.c.b16 %v497, %v496
    %v503 = vpack.c.b16 %v499, %v498
    %vm508 = vcmask 523264
    %v510 = vsel %vm508, %v475, 0
    %512 = vmatprep.subr.bf16.mxu0 0
    %513 = vmatpush1.bf16.msra.mxu0 %v500
    %514 = vmatprep.subr.bf16.mxu0 0
    %515 = vmatpush1.bf16.msra.mxu0 %v501
    %516 = vmatprep.subr.bf16.mxu0 0
    %517 = vmatpush1.bf16.msra.mxu0 %v502
    %518 = vmatprep.subr.bf16.mxu0 0
    %519 = vmatpush1.bf16.msra.mxu0 %v503
    %520 = vmatprep.subr.bf16.mxu0 0
    %521 = vmatpush1.bf16.msra.mxu0 0
    %522 = vmatprep.subr.bf16.mxu0 0
    %523 = vmatpush1.bf16.msra.mxu0 0
    %524 = vmatprep.subr.bf16.mxu0 0
    %525 = vmatpush1.bf16.msra.mxu0 0
    %526 = vmatprep.subr.bf16.mxu0 0
    %527 = vmatpush1.bf16.msra.mxu0 0
    %528 = vmatprep.subr.bf16.mxu0 0
    %529 = vmatpush1.bf16.msra.mxu0 0
    %530 = vmatprep.subr.bf16.mxu0 0
    %531 = vmatpush1.bf16.msra.mxu0 0
    %532 = vmatprep.subr.bf16.mxu0 0
    %533 = vmatpush1.bf16.msra.mxu0 0
    %534 = vmatprep.subr.bf16.mxu0 0
    %535 = vmatpush1.bf16.msra.mxu0 0
    %536 = vmatprep.subr.bf16.mxu0 0
    %537 = vmatpush1.bf16.msra.mxu0 0
    %538 = vmatprep.subr.bf16.mxu0 0
    %539 = vmatpush1.bf16.msra.mxu0 0
    %540 = vmatprep.subr.bf16.mxu0 0
    %541 = vmatpush1.bf16.msra.mxu0 0
    %542 = vmatprep.subr.bf16.mxu0 0
    %543 = vmatpush1.bf16.msra.mxu0 0
    %544 = vmatprep.mubr.bf16.mxu0 0
    %545 = vmatmul.mubr.bf16.gmra.mrb[0].mxu0 %v510
    %v546 = vpop.f32.mrb[0].mxu0
    %v547 = vadd.f32 0.0, %v546
    %v548 = vpop.f32.mrb[0].mxu0
    %v549 = vpop.f32.mrb[0].mxu0
    %v550 = vadd.f32 0.0, %v549
    %v551 = vpop.f32.mrb[0].mxu0
    %552 = vdwg.mxu0
    %v553 = vpack.c.bf16 %v550, %v547
    %v555 = vunpack.c.l.b16 %v553
    %v556 = vunpack.c.h.b16 %v553
    %v557 = vpack.c.b16 %v555, %v555
    %v558 = vpack.c.b16 %v556, %v556
    %561 = vst [vmem:[#allocation11] sm:$0xf] %v557
    %562 = vst [vmem:[#allocation11 + $0x4] sm:$0xf] %v558
    %v563 = vunpack.c.l.bf16 %v553
    %v564 = vunpack.c.h.bf16 %v553
    %v565 = vlaneseq
    %v566 = vand.u32 %v565, 127
    %v567 = vcvt.s32.f32 %v566
    %vm568 = vcmp.lt.s32.totalorder %v566, 8
    %v569 = vsel %vm568, %v563, -3.4028235e+38
    %v570 = vsel %vm568, %v564, -3.4028235e+38
    %571 = vmax.xlane.f32.xlu0 %v569
    %v572 = vpop.xlane.xlu0 %571
    %573 = vmax.xlane.f32.xlu0 %v570
    %v574 = vpop.xlane.xlu0 %573
    %vm575 = vcmp.eq.f32.partialorder %v569, %v572
    %vm576 = vcmp.eq.f32.partialorder %v570, %v574
    %v577 = vsel %vm575, %v567, 128.0
    %v578 = vsel %vm576, %v567, 128.0
    %579 = vmin.xlane.f32.xlu0 %v577
    %v580 = vpop.xlane.xlu0 %579
    %581 = vmin.xlane.f32.xlu0 %v578
    %v582 = vpop.xlane.xlu0 %581
    %vm583 = vcmp.eq.f32.partialorder %v567, %v580
    %vm584 = vcmp.eq.f32.partialorder %v567, %v582
    %v585 = vsel %vm583, -3.4028235e+38, %v569
    %v586 = vsel %vm584, -3.4028235e+38, %v570
    %587 = vmax.xlane.f32.xlu0 %v585
    %v588 = vpop.xlane.xlu0 %587
    %589 = vmax.xlane.f32.xlu0 %v586
    %v590 = vpop.xlane.xlu0 %589
    %vm591 = vcmp.eq.f32.partialorder %v585, %v588
    %vm592 = vcmp.eq.f32.partialorder %v586, %v590
    %v593 = vsel %vm591, %v567, 128.0
    %v594 = vsel %vm592, %v567, 128.0
    %595 = vmin.xlane.f32.xlu0 %v593
    %v596 = vpop.xlane.xlu0 %595
    %597 = vmin.xlane.f32.xlu0 %v594
    %v598 = vpop.xlane.xlu0 %597
    %v599 = vsub.f32 %v572, %v588
    %v600 = vsub.f32 %v574, %v590
    %v601 = vxor.u32 %v599, 2147483648
    %v602 = vxor.u32 %v600, 2147483648
    %v603 = vmul.f32 %v601, 1.442695
    %v604 = vpow.pop %v603
    %v605 = vmul.f32 %v602, 1.442695
    %v606 = vpow.pop %v605
    %v607 = vadd.f32 %v604, 1.0
    %v608 = vadd.f32 %v606, 1.0
    %v609 = vrcp.pop %v607
    %v610 = vmul.f32 1.0, %v609
    %v611 = vrcp.pop %v608
    %v612 = vmul.f32 1.0, %v611
    %v613 = vsub.f32 1.0, %v610
    %v614 = vsub.f32 1.0, %v612
    %vm615 = vcmp.eq.f32.partialorder %v580, 7.0
    %vm616 = vcmp.eq.f32.partialorder %v582, 7.0
    %vm617 = vcmp.eq.f32.partialorder %v596, 7.0
    %vm618 = vcmp.eq.f32.partialorder %v598, 7.0
    %v619 = vsel %vm617, 1.0, %v610
    %v620 = vsel %vm618, 1.0, %v612
    %v621 = vsel %vm615, 0.0, %v619
    %v622 = vsel %vm616, 0.0, %v620
    %v623 = vsel %vm615, 1.0, %v613
    %v624 = vsel %vm616, 1.0, %v614
    %v625 = vsel %vm617, 0.0, %v623
    %v626 = vsel %vm618, 0.0, %v624
    %vm627 = vcmp.eq.f32.partialorder %v580, 0.0
    %vm628 = vcmp.eq.f32.partialorder %v582, 0.0
    %vm629 = vcmp.eq.f32.partialorder %v596, 0.0
    %vm630 = vcmp.eq.f32.partialorder %v598, 0.0
    %v631 = vsel %vm627, %v621, 0.0
    %v632 = vsel %vm628, %v622, 0.0
    %v633 = vsel %vm629, %v625, 0.0
    %v634 = vsel %vm630, %v626, 0.0
    %v635 = vadd.f32 %v631, %v633
    %v636 = vadd.f32 %v632, %v634
    %vm637 = vcmp.eq.f32.partialorder %v580, 2.0
    %vm638 = vcmp.eq.f32.partialorder %v582, 2.0
    %vm639 = vcmp.eq.f32.partialorder %v596, 2.0
    %vm640 = vcmp.eq.f32.partialorder %v598, 2.0
    %v641 = vsel %vm637, %v621, 0.0
    %v642 = vsel %vm638, %v622, 0.0
    %v643 = vsel %vm639, %v625, 0.0
    %v644 = vsel %vm640, %v626, 0.0
    %v645 = vadd.f32 %v641, %v643
    %v646 = vadd.f32 %v642, %v644
    %vm647 = vcmp.eq.f32.partialorder %v580, 3.0
    %vm648 = vcmp.eq.f32.partialorder %v582, 3.0
    %vm649 = vcmp.eq.f32.partialorder %v596, 3.0
    %vm650 = vcmp.eq.f32.partialorder %v598, 3.0
    %v651 = vsel %vm647, %v621, 0.0
    %v652 = vsel %vm648, %v622, 0.0
    %v653 = vsel %vm649, %v625, 0.0
    %v654 = vsel %vm650, %v626, 0.0
    %v655 = vadd.f32 %v651, %v653
    %v656 = vadd.f32 %v652, %v654
    %vm657 = vcmp.ge.f32.partialorder %v580, 4.0
    %vm658 = vcmp.ge.f32.partialorder %v582, 4.0
    %vm659 = vcmp.ge.f32.partialorder %v596, 4.0
    %vm660 = vcmp.ge.f32.partialorder %v598, 4.0
    %v661 = vsel %vm657, %v621, 0.0
    %v662 = vsel %vm658, %v622, 0.0
    %v663 = vsel %vm659, %v625, 0.0
    %v664 = vsel %vm660, %v626, 0.0
    %v665 = vadd.f32 %v661, %v663
    %v666 = vadd.f32 %v662, %v664
    %v667 = vxor.u32 %v381, 2147483648
    %v668 = vxor.u32 %v383, 2147483648
    %v669 = vxor.u32 %v385, 2147483648
    %v670 = vxor.u32 %v387, 2147483648
    %v671 = vmul.f32 %v667, 1.442695
    %v672 = vpow.pop %v671
    %v673 = vmul.f32 %v668, 1.442695
    %v674 = vpow.pop %v673
    %v675 = vmul.f32 %v669, 1.442695
    %v676 = vpow.pop %v675
    %v677 = vmul.f32 %v670, 1.442695
    %v678 = vpow.pop %v677
    %v679 = vadd.f32 %v672, 1.0
    %v680 = vadd.f32 %v674, 1.0
    %v681 = vadd.f32 %v676, 1.0
    %v682 = vadd.f32 %v678, 1.0
    %v683 = vrcp.pop %v679
    %v684 = vmul.f32 1.0, %v683
    %v685 = vrcp.pop %v680
    %v686 = vmul.f32 1.0, %v685
    %v687 = vrcp.pop %v681
    %v688 = vmul.f32 1.0, %v687
    %v689 = vrcp.pop %v682
    %v690 = vmul.f32 1.0, %v689
    %v691 = vmul.f32 %v381, %v684
    %v692 = vmul.f32 %v383, %v686
    %v693 = vmul.f32 %v385, %v688
    %v694 = vmul.f32 %v387, %v690
    %v695 = vmul.f32 %v691, %v424
    %v696 = vmul.f32 %v692, %v426
    %v697 = vmul.f32 %v693, %v428
    %v698 = vmul.f32 %v694, %v430
    %v699 = vpack.c.bf16 %v697, %v695
    %v700 = vpack.c.bf16 %v698, %v696
    %v701 = vld [vmem:[#allocation8] sm:$0xf]
    %v702 = vld [vmem:[#allocation8 + $0x4] sm:$0xf]
    %v703 = vld [vmem:[#allocation8 + $0x8] sm:$0xf]
    %v704 = vld [vmem:[#allocation8 + $0xc] sm:$0xf]
    %v705 = vld [vmem:[#allocation8 + $0x10] sm:$0xf]
    %v706 = vld [vmem:[#allocation8 + $0x14] sm:$0xf]
    %v707 = vld [vmem:[#allocation8 + $0x18] sm:$0xf]
    %v708 = vld [vmem:[#allocation8 + $0x1c] sm:$0xf]
    %v709 = vld [vmem:[#allocation8 + $0x20] sm:$0xf]
    %v710 = vld [vmem:[#allocation8 + $0x24] sm:$0xf]
    %v711 = vld [vmem:[#allocation8 + $0x28] sm:$0xf]
    %v712 = vld [vmem:[#allocation8 + $0x2c] sm:$0xf]
    %v713 = vld [vmem:[#allocation8 + $0x30] sm:$0xf]
    %v714 = vld [vmem:[#allocation8 + $0x34] sm:$0xf]
    %v715 = vld [vmem:[#allocation8 + $0x38] sm:$0xf]
    %v716 = vld [vmem:[#allocation8 + $0x3c] sm:$0xf]
    %v717 = vld [vmem:[#allocation8 + $0x40] sm:$0xf]
    %v718 = vld [vmem:[#allocation8 + $0x44] sm:$0xf]
    %v719 = vld [vmem:[#allocation8 + $0x48] sm:$0xf]
    %v720 = vld [vmem:[#allocation8 + $0x4c] sm:$0xf]
    %v721 = vld [vmem:[#allocation8 + $0x50] sm:$0xf]
    %v722 = vld [vmem:[#allocation8 + $0x54] sm:$0xf]
    %v723 = vld [vmem:[#allocation8 + $0x58] sm:$0xf]
    %v724 = vld [vmem:[#allocation8 + $0x5c] sm:$0xf]
    %v725 = vld [vmem:[#allocation8 + $0x60] sm:$0xf]
    %v726 = vld [vmem:[#allocation8 + $0x64] sm:$0xf]
    %v727 = vld [vmem:[#allocation8 + $0x68] sm:$0xf]
    %v728 = vld [vmem:[#allocation8 + $0x6c] sm:$0xf]
    %v729 = vld [vmem:[#allocation8 + $0x70] sm:$0xf]
    %v730 = vld [vmem:[#allocation8 + $0x74] sm:$0xf]
    %v731 = vld [vmem:[#allocation8 + $0x78] sm:$0xf]
    %v732 = vld [vmem:[#allocation8 + $0x7c] sm:$0xf]
    %v765 = vunpack.c.l.b16 %v701
    %v766 = vunpack.c.l.b16 %v702
    %v767 = vunpack.c.l.b16 %v703
    %v768 = vunpack.c.l.b16 %v704
    %v769 = vunpack.c.l.b16 %v705
    %v770 = vunpack.c.l.b16 %v706
    %v771 = vunpack.c.l.b16 %v707
    %v772 = vunpack.c.l.b16 %v708
    %v773 = vunpack.c.l.b16 %v709
    %v774 = vunpack.c.l.b16 %v710
    %v775 = vunpack.c.l.b16 %v711
    %v776 = vunpack.c.l.b16 %v712
    %v777 = vunpack.c.l.b16 %v713
    %v778 = vunpack.c.l.b16 %v714
    %v779 = vunpack.c.l.b16 %v715
    %v780 = vunpack.c.l.b16 %v716
    %v781 = vunpack.c.l.b16 %v717
    %v782 = vunpack.c.l.b16 %v718
    %v783 = vunpack.c.l.b16 %v719
    %v784 = vunpack.c.l.b16 %v720
    %v785 = vunpack.c.l.b16 %v721
    %v786 = vunpack.c.l.b16 %v722
    %v787 = vunpack.c.l.b16 %v723
    %v788 = vunpack.c.l.b16 %v724
    %v789 = vunpack.c.l.b16 %v725
    %v790 = vunpack.c.l.b16 %v726
    %v791 = vunpack.c.l.b16 %v727
    %v792 = vunpack.c.l.b16 %v728
    %v793 = vunpack.c.l.b16 %v729
    %v794 = vunpack.c.l.b16 %v730
    %v795 = vunpack.c.l.b16 %v731
    %v796 = vunpack.c.l.b16 %v732
    %v797 = vpack.c.b16 %v766, %v765
    %v798 = vpack.c.b16 %v768, %v767
    %v799 = vpack.c.b16 %v770, %v769
    %v800 = vpack.c.b16 %v772, %v771
    %v801 = vpack.c.b16 %v774, %v773
    %v802 = vpack.c.b16 %v776, %v775
    %v803 = vpack.c.b16 %v778, %v777
    %v804 = vpack.c.b16 %v780, %v779
    %v805 = vpack.c.b16 %v782, %v781
    %v806 = vpack.c.b16 %v784, %v783
    %v807 = vpack.c.b16 %v786, %v785
    %v808 = vpack.c.b16 %v788, %v787
    %v809 = vpack.c.b16 %v790, %v789
    %v810 = vpack.c.b16 %v792, %v791
    %v811 = vpack.c.b16 %v794, %v793
    %v812 = vpack.c.b16 %v796, %v795
    %829 = vmatprep.subr.bf16.mxu0 0
    %830 = vmatpush1.bf16.msra.mxu0 %v797
    %831 = vmatprep.subr.bf16.mxu0 0
    %832 = vmatpush1.bf16.msra.mxu0 %v798
    %833 = vmatprep.subr.bf16.mxu0 0
    %834 = vmatpush1.bf16.msra.mxu0 %v799
    %835 = vmatprep.subr.bf16.mxu0 0
    %836 = vmatpush1.bf16.msra.mxu0 %v800
    %837 = vmatprep.subr.bf16.mxu0 0
    %838 = vmatpush1.bf16.msra.mxu0 %v801
    %839 = vmatprep.subr.bf16.mxu0 0
    %840 = vmatpush1.bf16.msra.mxu0 %v802
    %841 = vmatprep.subr.bf16.mxu0 0
    %842 = vmatpush1.bf16.msra.mxu0 %v803
    %843 = vmatprep.subr.bf16.mxu0 0
    %844 = vmatpush1.bf16.msra.mxu0 %v804
    %845 = vmatprep.subr.bf16.mxu0 0
    %846 = vmatpush1.bf16.msra.mxu0 %v805
    %847 = vmatprep.subr.bf16.mxu0 0
    %848 = vmatpush1.bf16.msra.mxu0 %v806
    %849 = vmatprep.subr.bf16.mxu0 0
    %850 = vmatpush1.bf16.msra.mxu0 %v807
    %851 = vmatprep.subr.bf16.mxu0 0
    %852 = vmatpush1.bf16.msra.mxu0 %v808
    %853 = vmatprep.subr.bf16.mxu0 0
    %854 = vmatpush1.bf16.msra.mxu0 %v809
    %855 = vmatprep.subr.bf16.mxu0 0
    %856 = vmatpush1.bf16.msra.mxu0 %v810
    %857 = vmatprep.subr.bf16.mxu0 0
    %858 = vmatpush1.bf16.msra.mxu0 %v811
    %859 = vmatprep.subr.bf16.mxu0 0
    %860 = vmatpush1.bf16.msra.mxu0 %v812
    %861 = vmatprep.mubr.bf16.mxu0 %v700
    %862 = vmatmul.mubr.bf16.gmra.mrb[0].mxu0 %v699
    %v863 = vpop.f32.mrb[0].mxu0
    %v864 = vadd.f32 0.0, %v863
    %v865 = vpop.f32.mrb[0].mxu0
    %v866 = vpop.f32.mrb[0].mxu0
    %v867 = vadd.f32 0.0, %v866
    %v868 = vpop.f32.mrb[0].mxu0
    %869 = vdwg.mxu0
    %872 = vrot.lane.b32.xlu0 %v467, 127
    %v873 = vpop.permute.xlu0 %872
    %874 = vrot.lane.b32.xlu0 %v470, 127
    %v875 = vpop.permute.xlu0 %874
    %v878 = vsub.f32 %v467, %v873
    %v879 = vsub.f32 %v470, %v875
    %v880 = vxor.u32 %v878, 2147483648
    %v881 = vxor.u32 %v879, 2147483648
    %v882 = vmul.f32 %v880, 1.442695
    %v883 = vpow.pop %v882
    %v884 = vmul.f32 %v881, 1.442695
    %v885 = vpow.pop %v884
    %v886 = vadd.f32 %v883, 1.0
    %v887 = vadd.f32 %v885, 1.0
    %v888 = vrcp.pop %v886
    %v889 = vmul.f32 1.0, %v888
    %v890 = vrcp.pop %v887
    %v891 = vmul.f32 1.0, %v890
    %v892 = vld [vmem:[%s4] sm:$0x3]
    %v893 = vmul.f32 %v645, %v889
    %v894 = vmul.f32 %v646, %v891
    %v895 = vadd.f32 %v635, %v893
    %v896 = vadd.f32 %v636, %v894
    %v897 = vmul.f32 %v655, %v889
    %v898 = vmul.f32 %v656, %v891
    %901 = vrot.lane.b32.xlu0 %v897, 126
    %v902 = vpop.permute.xlu0 %901
    %903 = vrot.lane.b32.xlu0 %v898, 126
    %v904 = vpop.permute.xlu0 %903
    %v907 = vadd.f32 %v895, %v902
    %v908 = vadd.f32 %v896, %v904
    %v909 = vsub.f32 1.0, %v889
    %v910 = vsub.f32 1.0, %v891
    %v911 = vmul.f32 %v645, %v909
    %v912 = vmul.f32 %v646, %v910
    %v913 = vmul.f32 %v655, %v909
    %v914 = vmul.f32 %v656, %v910
    %916 = vset.pattern.permute.xlu0 64
    %917 = vperm.xlu0 %916, %v907
    %v918 = vpop.permute.xlu0 %917
    %921 = vset.pattern.permute.xlu0 64
    %922 = vperm.xlu0 %921, %v908
    %v923 = vpop.permute.xlu0 %922
    %v925 = vmul.f32 %v918, %v82
    %v926 = vmul.f32 %v923, %v83
    %v927 = vmul.f32 %v665, %v864
    %v928 = vmul.f32 %v666, %v867
    %v929 = vadd.f32 %v925, %v927
    %v930 = vadd.f32 %v926, %v928
    %932 = vset.pattern.permute.xlu0 64
    %933 = vperm.xlu0 %932, %v911
    %v934 = vpop.permute.xlu0 %933
    %937 = vset.pattern.permute.xlu0 64
    %938 = vperm.xlu0 %937, %v912
    %v939 = vpop.permute.xlu0 %938
    %v941 = vlaneseq
    %v942 = vshrl.u32 %v941, 7
    %v943 = vsub.s32 0, %v942
    %v944 = vrot.slane %v892, %v943
    %v945 = vmul.f32 %v934, %v944
    %v946 = vmul.f32 %v939, %v944
    %v947 = vadd.f32 %v929, %v945
    %v948 = vadd.f32 %v930, %v946
    %950 = vset.pattern.permute.xlu0 66
    %951 = vperm.xlu0 %950, %v913
    %v952 = vpop.permute.xlu0 %951
    %955 = vset.pattern.permute.xlu0 66
    %956 = vperm.xlu0 %955, %v914
    %v957 = vpop.permute.xlu0 %956
    %v959 = vlaneseq
    %v960 = vshrl.u32 %v959, 7
    %v961 = vsub.s32 1, %v960
    %v962 = vrot.slane %v892, %v961
    %v963 = vmul.f32 %v952, %v962
    %v964 = vmul.f32 %v957, %v962
    %v965 = vadd.f32 %v947, %v963
    %v966 = vadd.f32 %v948, %v964
    %967 = vst [vmem:[#allocation10] sm:$0xff] %v965
    %968 = vst [vmem:[#allocation10 + $0x8] sm:$0xff] %v966
    // Predicated region
    $region38: #{tpu_custom_call.1} parent=1 // pred_check
      _
    $region39: #{tpu_custom_call.1} parent=1 // pred_check_branch
      %970 = sbr.rel (0) target = $region41
    $region40: #{tpu_custom_call.1} parent=1 // pred_region
      %s972 = ssub.s32 256, 256
      %973 = vsyncadd [#allocation4], %s972
      %s974 = sshll.u32 [#allocation10], 4
      %s975 = int_to_ptr.vmem [resolvable:$true] %s974
      %980 = dma.vmem_to_hbm [thread:$0]  %s975, 256, %s5, [#allocation4], 128, 128, 8
    $region41: #{tpu_custom_call.1} parent=1 // pred_fallthru
      _
    // Predicated region
    $region42: #{tpu_custom_call.1} parent=1 // pred_check
      _
    $region43: #{tpu_custom_call.1} parent=1 // pred_check_branch
      %982 = sbr.rel (0) target = $region45
    $region44: #{tpu_custom_call.1} parent=1 // pred_region
      %s984 = ssub.s32 128, 128
      %985 = vsyncadd [#allocation12], %s984
      %s986 = sshll.u32 [#allocation11], 4
      %s987 = int_to_ptr.vmem [resolvable:$true] %s986
      %992 = dma.vmem_to_hbm [thread:$0]  %s987, 128, %s6, [#allocation12], 64, 64, 4
    $region45: #{tpu_custom_call.1} parent=1 // pred_fallthru
      _
    // Predicated region
    $region46: #{tpu_custom_call.1} parent=1 // pred_check
      _
    $region47: #{tpu_custom_call.1} parent=1 // pred_check_branch
      %994 = sbr.rel (0) target = $region49
    $region48: #{tpu_custom_call.1} parent=1 // pred_region
      %995 = dma.done [#allocation4], 256
    $region49: #{tpu_custom_call.1} parent=1 // pred_fallthru
      _
    // Predicated region
    $region50: #{tpu_custom_call.1} parent=1 // pred_check
      _
    $region51: #{tpu_custom_call.1} parent=1 // pred_check_branch
      %997 = sbr.rel (0) target = $region53
    $region52: #{tpu_custom_call.1} parent=1 // pred_region
      %998 = dma.done [#allocation12], 128
    $region53: #{tpu_custom_call.1} parent=1 // pred_fallthru
      _
    %999 = vsyncpa [#allocation3], 1
    %1000 = vsyncpa [#allocation6], 1
    %1001 = vsyncpa [#allocation9], 1
    %1002 = vsyncpa [#allocation4], 1
    %1003 = vsyncpa [#allocation12], 1

// kernel: tpu_custom_call.1
$region0: #{tpu_custom_call.1}
  #allocation0 [shape = 'u32[]', space=smem, size = 0x4, offset = 0x4, fixed_abs, tag = 'smem constant byte address 0x4 - core index']
  #allocation1 [shape = 'u32[144,128]{1,0:T(1,128)}', space=vmem, size = 0x12000, scoped, tag = 'internal scratch']
  %s0 = inlined_call_operand.hbm [shape: bf16[16,128], index: 0, kind: input, shape index: {}]
  %s1 = inlined_call_operand.hbm [shape: bf16[128,640], index: 1, kind: input, shape index: {}]
  %s2 = inlined_call_operand.hbm [shape: bf16[64,128], index: 2, kind: input, shape index: {}]
  %s3 = inlined_call_operand.hbm [shape: bf16[256,128], index: 3, kind: input, shape index: {}]
  %s4 = inlined_call_operand.vmem [shape: f32[2,128], index: 4, kind: input, shape index: {}]
  %s5 = inlined_call_operand.hbm [shape: f32[16,128], index: 5, kind: output, shape index: {0}]
  %s6 = inlined_call_operand.hbm [shape: bf16[16,128], index: 6, kind: output, shape index: {1}]
  %7 = xla_tuple %s5, %s6
  %s8 = sld [smem:[#allocation0]]
  $region54: #{tpu_custom_call.1} parent=0
    _
  %s10 = ssub.s32 1, %s8
  %s11 = scalar_select 0, %s10, %s8
  $region1: #{tpu_custom_call.1} parent=0
    #allocation2 [shape = 'u8[4096]{0}', space=vmem, size = 0x1000, scoped, tag = 'input window, operand 0, single buffered']
    #allocation3 [shape = 's32[1]{0}', space=sflag, size = 0x4, scoped, tag = 'scoped memory for tpu_custom_call.1']
    #allocation4 [shape = 's32[1]{0}', space=sflag, size = 0x4, scoped, tag = 'scoped memory for tpu_custom_call.1']
    #allocation5 [shape = 'u8[163840]{0}', space=vmem, size = 0x28000, scoped, tag = 'input window, operand 1, single buffered']
    #allocation6 [shape = 's32[1]{0}', space=sflag, size = 0x4, scoped, tag = 'scoped memory for tpu_custom_call.1']
    #allocation7 [shape = 'u8[16384]{0}', space=vmem, size = 0x4000, scoped, tag = 'input window, operand 2, single buffered']
    #allocation8 [shape = 'u8[65536]{0}', space=vmem, size = 0x10000, scoped, tag = 'input window, operand 3, single buffered']
    #allocation9 [shape = 's32[1]{0}', space=sflag, size = 0x4, scoped, tag = 'scoped memory for tpu_custom_call.1']
    #allocation10 [shape = 'u8[8192]{0}', space=vmem, size = 0x2000, scoped, tag = 'output window, operand 0, single buffered']
    #allocation11 [shape = 'u8[4096]{0}', space=vmem, size = 0x1000, scoped, tag = 'output window, operand 1, single buffered']
    #allocation12 [shape = 's32[1]{0}', space=sflag, size = 0x4, scoped, tag = 'scoped memory for tpu_custom_call.1']
    %12 = vsyncpa [#allocation3], 0
    %13 = vsyncpa [#allocation6], 0
    %14 = vsyncpa [#allocation9], 0
    %15 = vsyncpa [#allocation4], 0
    %16 = vsyncpa [#allocation12], 0
    // Predicated region
    $region2: #{tpu_custom_call.1} parent=1 // pred_check
      _
    $region3: #{tpu_custom_call.1} parent=1 // pred_check_branch
      %18 = sbr.rel (0) target = $region5
    $region4: #{tpu_custom_call.1} parent=1 // pred_region
      %s20 = ssub.s32 128, 128
      %21 = vsyncadd [#allocation3], %s20
      %s22 = sshll.u32 [#allocation2], 4
      %s23 = int_to_ptr.vmem [resolvable:$true] %s22
      %28 = dma.hbm_to_vmem [thread:$0]  %s0, 128, %s23, [#allocation3], 64, 64, 4
    $region5: #{tpu_custom_call.1} parent=1 // pred_fallthru
      _
    // Predicated region
    $region6: #{tpu_custom_call.1} parent=1 // pred_check
      _
    $region7: #{tpu_custom_call.1} parent=1 // pred_check_branch
      %30 = sbr.rel (0) target = $region9
    $region8: #{tpu_custom_call.1} parent=1 // pred_region
      %s32 = ssub.s32 5120, 5120
      %33 = vsyncadd [#allocation6], %s32
      %s34 = sshll.u32 [#allocation5], 4
      %s35 = int_to_ptr.vmem [resolvable:$true] %s34
      %40 = dma.hbm_to_vmem [thread:$0]  %s1, 5120, %s35, [#allocation6], 320, 320, 20
    $region9: #{tpu_custom_call.1} parent=1 // pred_fallthru
      _
    // Predicated region
    $region10: #{tpu_custom_call.1} parent=1 // pred_check
      _
    $region11: #{tpu_custom_call.1} parent=1 // pred_check_branch
      %42 = sbr.rel (0) target = $region13
    $region12: #{tpu_custom_call.1} parent=1 // pred_region
      %s44 = ssub.s32 512, 512
      %45 = vsyncadd [#allocation6], %s44
      %s46 = sshll.u32 [#allocation7], 4
      %s47 = int_to_ptr.vmem [resolvable:$true] %s46
      %52 = dma.hbm_to_vmem [thread:$0]  %s2, 512, %s47, [#allocation6], 64, 64, 4
    $region13: #{tpu_custom_call.1} parent=1 // pred_fallthru
      _
    // Predicated region
    $region14: #{tpu_custom_call.1} parent=1 // pred_check
      _
    $region15: #{tpu_custom_call.1} parent=1 // pred_check_branch
      %54 = sbr.rel (0) target = $region17
    $region16: #{tpu_custom_call.1} parent=1 // pred_region
      %s56 = ssub.s32 2048, 2048
      %57 = vsyncadd [#allocation9], %s56
      %s58 = sshll.u32 [#allocation8], 4
      %s59 = int_to_ptr.vmem [resolvable:$true] %s58
      %64 = dma.hbm_to_vmem [thread:$0]  %s3, 2048, %s59, [#allocation9], 64, 64, 4
    $region17: #{tpu_custom_call.1} parent=1 // pred_fallthru
      _
    // Predicated region
    $region18: #{tpu_custom_call.1} parent=1 // pred_check
      _
    $region19: #{tpu_custom_call.1} parent=1 // pred_check_branch
      %66 = sbr.rel (0) target = $region21
    $region20: #{tpu_custom_call.1} parent=1 // pred_region
      _
    $region21: #{tpu_custom_call.1} parent=1 // pred_fallthru
      _
    // Predicated region
    $region22: #{tpu_custom_call.1} parent=1 // pred_check
      _
    $region23: #{tpu_custom_call.1} parent=1 // pred_check_branch
      %68 = sbr.rel (0) target = $region25
    $region24: #{tpu_custom_call.1} parent=1 // pred_region
      %69 = dma.done [#allocation3], 128
    $region25: #{tpu_custom_call.1} parent=1 // pred_fallthru
      _
    // Predicated region
    $region26: #{tpu_custom_call.1} parent=1 // pred_check
      _
    $region27: #{tpu_custom_call.1} parent=1 // pred_check_branch
      %71 = sbr.rel (0) target = $region29
    $region28: #{tpu_custom_call.1} parent=1 // pred_region
      %72 = dma.done [#allocation6], 5120
    $region29: #{tpu_custom_call.1} parent=1 // pred_fallthru
      _
    // Predicated region
    $region30: #{tpu_custom_call.1} parent=1 // pred_check
      _
    $region31: #{tpu_custom_call.1} parent=1 // pred_check_branch
      %74 = sbr.rel (0) target = $region33
    $region32: #{tpu_custom_call.1} parent=1 // pred_region
      %75 = dma.done [#allocation6], 512
    $region33: #{tpu_custom_call.1} parent=1 // pred_fallthru
      _
    // Predicated region
    $region34: #{tpu_custom_call.1} parent=1 // pred_check
      _
    $region35: #{tpu_custom_call.1} parent=1 // pred_check_branch
      %77 = sbr.rel (0) target = $region37
    $region36: #{tpu_custom_call.1} parent=1 // pred_region
      %78 = dma.done [#allocation9], 2048
    $region37: #{tpu_custom_call.1} parent=1 // pred_fallthru
      _
    %v80 = vld [vmem:[#allocation2] sm:$0xf]
    %v81 = vld [vmem:[#allocation2 + $0x4] sm:$0xf]
    %v82 = vunpack.c.l.bf16 %v80
    %v83 = vunpack.c.l.bf16 %v81
    %v84 = vld [vmem:[#allocation5] sm:$0xff]
    %v85 = vld [vmem:[#allocation5 + $0x8] sm:$0xff]
    %v86 = vld [vmem:[#allocation5 + $0x10] sm:$0xf]
    %v87 = vld [vmem:[#allocation5 + $0x14] sm:$0xff]
    %v88 = vld [vmem:[#allocation5 + $0x1c] sm:$0xff]
    %v89 = vld [vmem:[#allocation5 + $0x24] sm:$0xf]
    %v90 = vld [vmem:[#allocation5 + $0x28] sm:$0xff]
    %v91 = vld [vmem:[#allocation5 + $0x30] sm:$0xff]
    %v92 = vld [vmem:[#allocation5 + $0x38] sm:$0xf]
    %v93 = vld [vmem:[#allocation5 + $0x3c] sm:$0xff]
    %v94 = vld [vmem:[#allocation5 + $0x44] sm:$0xff]
    %v95 = vld [vmem:[#allocation5 + $0x4c] sm:$0xf]
    %v96 = vld [vmem:[#allocation5 + $0x50] sm:$0xff]
    %v97 = vld [vmem:[#allocation5 + $0x58] sm:$0xff]
    %v98 = vld [vmem:[#allocation5 + $0x60] sm:$0xf]
    %v99 = vld [vmem:[#allocation5 + $0x64] sm:$0xff]
    %v100 = vld [vmem:[#allocation5 + $0x6c] sm:$0xff]
    %v101 = vld [vmem:[#allocation5 + $0x74] sm:$0xf]
    %v102 = vld [vmem:[#allocation5 + $0x78] sm:$0xff]
    %v103 = vld [vmem:[#allocation5 + $0x80] sm:$0xff]
    %v104 = vld [vmem:[#allocation5 + $0x88] sm:$0xf]
    %v105 = vld [vmem:[#allocation5 + $0x8c] sm:$0xff]
    %v106 = vld [vmem:[#allocation5 + $0x94] sm:$0xff]
    %v107 = vld [vmem:[#allocation5 + $0x9c] sm:$0xf]
    %v108 = vld [vmem:[#allocation5 + $0xa0] sm:$0xff]
    %v109 = vld [vmem:[#allocation5 + $0xa8] sm:$0xff]
    %v110 = vld [vmem:[#allocation5 + $0xb0] sm:$0xf]
    %v111 = vld [vmem:[#allocation5 + $0xb4] sm:$0xff]
    %v112 = vld [vmem:[#allocation5 + $0xbc] sm:$0xff]
    %v113 = vld [vmem:[#allocation5 + $0xc4] sm:$0xf]
    %v114 = vld [vmem:[#allocation5 + $0xc8] sm:$0xff]
    %v115 = vld [vmem:[#allocation5 + $0xd0] sm:$0xff]
    %v116 = vld [vmem:[#allocation5 + $0xd8] sm:$0xf]
    %v117 = vld [vmem:[#allocation5 + $0xdc] sm:$0xff]
    %v118 = vld [vmem:[#allocation5 + $0xe4] sm:$0xff]
    %v119 = vld [vmem:[#allocation5 + $0xec] sm:$0xf]
    %v120 = vld [vmem:[#allocation5 + $0xf0] sm:$0xff]
    %v121 = vld [vmem:[#allocation5 + $0xf8] sm:$0xff]
    %v122 = vld [vmem:[#allocation5 + $0x100] sm:$0xf]
    %v123 = vld [vmem:[#allocation5 + $0x104] sm:$0xff]
    %v124 = vld [vmem:[#allocation5 + $0x10c] sm:$0xff]
    %v125 = vld [vmem:[#allocation5 + $0x114] sm:$0xf]
    %v126 = vld [vmem:[#allocation5 + $0x118] sm:$0xff]
    %v127 = vld [vmem:[#allocation5 + $0x120] sm:$0xff]
    %v128 = vld [vmem:[#allocation5 + $0x128] sm:$0xf]
    %v129 = vld [vmem:[#allocation5 + $0x12c] sm:$0xff]
    %v130 = vld [vmem:[#allocation5 + $0x134] sm:$0xff]
    %v131 = vld [vmem:[#allocation5 + $0x13c] sm:$0xf]
    %v134 = vunpack.c.l.b16 %v80
    %v135 = vunpack.c.l.b16 %v81
    %v136 = vpack.c.b16 %v135, %v134
    %v186 = vunpack.c.l.b16 %v84
    %v187 = vunpack.c.h.b16 %v84
    %v188 = vunpack.c.l.b16 %v85
    %v189 = vunpack.c.h.b16 %v85
    %v190 = vunpack.c.l.b16 %v86
    %v191 = vunpack.c.l.b16 %v87
    %v192 = vunpack.c.h.b16 %v87
    %v193 = vunpack.c.l.b16 %v88
    %v194 = vunpack.c.h.b16 %v88
    %v195 = vunpack.c.l.b16 %v89
    %v196 = vunpack.c.l.b16 %v90
    %v197 = vunpack.c.h.b16 %v90
    %v198 = vunpack.c.l.b16 %v91
    %v199 = vunpack.c.h.b16 %v91
    %v200 = vunpack.c.l.b16 %v92
    %v201 = vunpack.c.l.b16 %v93
    %v202 = vunpack.c.h.b16 %v93
    %v203 = vunpack.c.l.b16 %v94
    %v204 = vunpack.c.h.b16 %v94
    %v205 = vunpack.c.l.b16 %v95
    %v206 = vunpack.c.l.b16 %v96
    %v207 = vunpack.c.h.b16 %v96
    %v208 = vunpack.c.l.b16 %v97
    %v209 = vunpack.c.h.b16 %v97
    %v210 = vunpack.c.l.b16 %v98
    %v211 = vunpack.c.l.b16 %v99
    %v212 = vunpack.c.h.b16 %v99
    %v213 = vunpack.c.l.b16 %v100
    %v214 = vunpack.c.h.b16 %v100
    %v215 = vunpack.c.l.b16 %v101
    %v216 = vunpack.c.l.b16 %v102
    %v217 = vunpack.c.h.b16 %v102
    %v218 = vunpack.c.l.b16 %v103
    %v219 = vunpack.c.h.b16 %v103
    %v220 = vunpack.c.l.b16 %v104
    %v221 = vunpack.c.l.b16 %v105
    %v222 = vunpack.c.h.b16 %v105
    %v223 = vunpack.c.l.b16 %v106
    %v224 = vunpack.c.h.b16 %v106
    %v225 = vunpack.c.l.b16 %v107
    %v226 = vunpack.c.l.b16 %v108
    %v227 = vunpack.c.h.b16 %v108
    %v228 = vunpack.c.l.b16 %v109
    %v229 = vunpack.c.h.b16 %v109
    %v230 = vunpack.c.l.b16 %v110
    %v231 = vunpack.c.l.b16 %v111
    %v232 = vunpack.c.h.b16 %v111
    %v233 = vunpack.c.l.b16 %v112
    %v234 = vunpack.c.h.b16 %v112
    %v235 = vunpack.c.l.b16 %v113
    %v236 = vunpack.c.l.b16 %v114
    %v237 = vunpack.c.h.b16 %v114
    %v238 = vunpack.c.l.b16 %v115
    %v239 = vunpack.c.h.b16 %v115
    %v240 = vunpack.c.l.b16 %v116
    %v241 = vunpack.c.l.b16 %v117
    %v242 = vunpack.c.h.b16 %v117
    %v243 = vunpack.c.l.b16 %v118
    %v244 = vunpack.c.h.b16 %v118
    %v245 = vunpack.c.l.b16 %v119
    %v246 = vunpack.c.l.b16 %v120
    %v247 = vunpack.c.h.b16 %v120
    %v248 = vunpack.c.l.b16 %v121
    %v249 = vunpack.c.h.b16 %v121
    %v250 = vunpack.c.l.b16 %v122
    %v251 = vunpack.c.l.b16 %v123
    %v252 = vunpack.c.h.b16 %v123
    %v253 = vunpack.c.l.b16 %v124
    %v254 = vunpack.c.h.b16 %v124
    %v255 = vunpack.c.l.b16 %v125
    %v256 = vunpack.c.l.b16 %v126
    %v257 = vunpack.c.h.b16 %v126
    %v258 = vunpack.c.l.b16 %v127
    %v259 = vunpack.c.h.b16 %v127
    %v260 = vunpack.c.l.b16 %v128
    %v261 = vunpack.c.l.b16 %v129
    %v262 = vunpack.c.h.b16 %v129
    %v263 = vunpack.c.l.b16 %v130
    %v264 = vunpack.c.h.b16 %v130
    %v265 = vunpack.c.l.b16 %v131
    %v266 = vpack.c.b16 %v191, %v186
    %v267 = vpack.c.b16 %v192, %v187
    %v268 = vpack.c.b16 %v193, %v188
    %v269 = vpack.c.b16 %v194, %v189
    %v270 = vpack.c.b16 %v195, %v190
    %v271 = vpack.c.b16 %v201, %v196
    %v272 = vpack.c.b16 %v202, %v197
    %v273 = vpack.c.b16 %v203, %v198
    %v274 = vpack.c.b16 %v204, %v199
    %v275 = vpack.c.b16 %v205, %v200
    %v276 = vpack.c.b16 %v211, %v206
    %v277 = vpack.c.b16 %v212, %v207
    %v278 = vpack.c.b16 %v213, %v208
    %v279 = vpack.c.b16 %v214, %v209
    %v280 = vpack.c.b16 %v215, %v210
    %v281 = vpack.c.b16 %v221, %v216
    %v282 = vpack.c.b16 %v222, %v217
    %v283 = vpack.c.b16 %v223, %v218
    %v284 = vpack.c.b16 %v224, %v219
    %v285 = vpack.c.b16 %v225, %v220
    %v286 = vpack.c.b16 %v231, %v226
    %v287 = vpack.c.b16 %v232, %v227
    %v288 = vpack.c.b16 %v233, %v228
    %v289 = vpack.c.b16 %v234, %v229
    %v290 = vpack.c.b16 %v235, %v230
    %v291 = vpack.c.b16 %v241, %v236
    %v292 = vpack.c.b16 %v242, %v237
    %v293 = vpack.c.b16 %v243, %v238
    %v294 = vpack.c.b16 %v244, %v239
    %v295 = vpack.c.b16 %v245, %v240
    %v296 = vpack.c.b16 %v251, %v246
    %v297 = vpack.c.b16 %v252, %v247
    %v298 = vpack.c.b16 %v253, %v248
    %v299 = vpack.c.b16 %v254, %v249
    %v300 = vpack.c.b16 %v255, %v250
    %v301 = vpack.c.b16 %v261, %v256
    %v302 = vpack.c.b16 %v262, %v257
    %v303 = vpack.c.b16 %v263, %v258
    %v304 = vpack.c.b16 %v264, %v259
    %v305 = vpack.c.b16 %v265, %v260
    %346 = vmatprep.subr.bf16.mxu0 %v267
    %347 = vmatpush1.bf16.msra.mxu0 %v266
    %348 = vmatprep.subr.bf16.mxu0 %v272
    %349 = vmatpush1.bf16.msra.mxu0 %v271
    %350 = vmatprep.subr.bf16.mxu0 %v277
    %351 = vmatpush1.bf16.msra.mxu0 %v276
    %352 = vmatprep.subr.bf16.mxu0 %v282
    %353 = vmatpush1.bf16.msra.mxu0 %v281
    %354 = vmatprep.subr.bf16.mxu0 %v287
    %355 = vmatpush1.bf16.msra.mxu0 %v286
    %356 = vmatprep.subr.bf16.mxu0 %v292
    %357 = vmatpush1.bf16.msra.mxu0 %v291
    %358 = vmatprep.subr.bf16.mxu0 %v297
    %359 = vmatpush1.bf16.msra.mxu0 %v296
    %360 = vmatprep.subr.bf16.mxu0 %v302
    %361 = vmatpush1.bf16.msra.mxu0 %v301
    %362 = vmatprep.subr.bf16.mxu0 0
    %363 = vmatpush1.bf16.msra.mxu0 0
    %364 = vmatprep.subr.bf16.mxu0 0
    %365 = vmatpush1.bf16.msra.mxu0 0
    %366 = vmatprep.subr.bf16.mxu0 0
    %367 = vmatpush1.bf16.msra.mxu0 0
    %368 = vmatprep.subr.bf16.mxu0 0
    %369 = vmatpush1.bf16.msra.mxu0 0
    %370 = vmatprep.subr.bf16.mxu0 0
    %371 = vmatpush1.bf16.msra.mxu0 0
    %372 = vmatprep.subr.bf16.mxu0 0
    %373 = vmatpush1.bf16.msra.mxu0 0
    %374 = vmatprep.subr.bf16.mxu0 0
    %375 = vmatpush1.bf16.msra.mxu0 0
    %376 = vmatprep.subr.bf16.mxu0 0
    %377 = vmatpush1.bf16.msra.mxu0 0
    %378 = vmatprep.mubr.bf16.mxu0 0
    %379 = vmatmul.mubr.bf16.gmra.mrb[0].mxu0 %v136
    %v380 = vpop.f32.mrb[0].mxu0
    %v381 = vadd.f32 0.0, %v380
    %v382 = vpop.f32.mrb[0].mxu0
    %v383 = vadd.f32 0.0, %v382
    %v384 = vpop.f32.mrb[0].mxu0
    %v385 = vadd.f32 0.0, %v384
    %v386 = vpop.f32.mrb[0].mxu0
    %v387 = vadd.f32 0.0, %v386
    %388 = vdwg.mxu0
    %389 = vmatprep.subr.bf16.mxu0 %v269
    %390 = vmatpush1.bf16.msra.mxu0 %v268
    %391 = vmatprep.subr.bf16.mxu0 %v274
    %392 = vmatpush1.bf16.msra.mxu0 %v273
    %393 = vmatprep.subr.bf16.mxu0 %v279
    %394 = vmatpush1.bf16.msra.mxu0 %v278
    %395 = vmatprep.subr.bf16.mxu0 %v284
    %396 = vmatpush1.bf16.msra.mxu0 %v283
    %397 = vmatprep.subr.bf16.mxu0 %v289
    %398 = vmatpush1.bf16.msra.mxu0 %v288
    %399 = vmatprep.subr.bf16.mxu0 %v294
    %400 = vmatpush1.bf16.msra.mxu0 %v293
    %401 = vmatprep.subr.bf16.mxu0 %v299
    %402 = vmatpush1.bf16.msra.mxu0 %v298
    %403 = vmatprep.subr.bf16.mxu0 %v304
    %404 = vmatpush1.bf16.msra.mxu0 %v303
    %405 = vmatprep.subr.bf16.mxu0 0
    %406 = vmatpush1.bf16.msra.mxu0 0
    %407 = vmatprep.subr.bf16.mxu0 0
    %408 = vmatpush1.bf16.msra.mxu0 0
    %409 = vmatprep.subr.bf16.mxu0 0
    %410 = vmatpush1.bf16.msra.mxu0 0
    %411 = vmatprep.subr.bf16.mxu0 0
    %412 = vmatpush1.bf16.msra.mxu0 0
    %413 = vmatprep.subr.bf16.mxu0 0
    %414 = vmatpush1.bf16.msra.mxu0 0
    %415 = vmatprep.subr.bf16.mxu0 0
    %416 = vmatpush1.bf16.msra.mxu0 0
    %417 = vmatprep.subr.bf16.mxu0 0
    %418 = vmatpush1.bf16.msra.mxu0 0
    %419 = vmatprep.subr.bf16.mxu0 0
    %420 = vmatpush1.bf16.msra.mxu0 0
    %421 = vmatprep.mubr.bf16.mxu0 0
    %422 = vmatmul.mubr.bf16.gmra.mrb[0].mxu0 %v136
    %v423 = vpop.f32.mrb[0].mxu0
    %v424 = vadd.f32 0.0, %v423
    %v425 = vpop.f32.mrb[0].mxu0
    %v426 = vadd.f32 0.0, %v425
    %v427 = vpop.f32.mrb[0].mxu0
    %v428 = vadd.f32 0.0, %v427
    %v429 = vpop.f32.mrb[0].mxu0
    %v430 = vadd.f32 0.0, %v429
    %431 = vdwg.mxu0
    %432 = vmatprep.subr.bf16.mxu0 0
    %433 = vmatpush1.bf16.msra.mxu0 %v270
    %434 = vmatprep.subr.bf16.mxu0 0
    %435 = vmatpush1.bf16.msra.mxu0 %v275
    %436 = vmatprep.subr.bf16.mxu0 0
    %437 = vmatpush1.bf16.msra.mxu0 %v280
    %438 = vmatprep.subr.bf16.mxu0 0
    %439 = vmatpush1.bf16.msra.mxu0 %v285
    %440 = vmatprep.subr.bf16.mxu0 0
    %441 = vmatpush1.bf16.msra.mxu0 %v290
    %442 = vmatprep.subr.bf16.mxu0 0
    %443 = vmatpush1.bf16.msra.mxu0 %v295
    %444 = vmatprep.subr.bf16.mxu0 0
    %445 = vmatpush1.bf16.msra.mxu0 %v300
    %446 = vmatprep.subr.bf16.mxu0 0
    %447 = vmatpush1.bf16.msra.mxu0 %v305
    %448 = vmatprep.subr.bf16.mxu0 0
    %449 = vmatpush1.bf16.msra.mxu0 0
    %450 = vmatprep.subr.bf16.mxu0 0
    %451 = vmatpush1.bf16.msra.mxu0 0
    %452 = vmatprep.subr.bf16.mxu0 0
    %453 = vmatpush1.bf16.msra.mxu0 0
    %454 = vmatprep.subr.bf16.mxu0 0
    %455 = vmatpush1.bf16.msra.mxu0 0
    %456 = vmatprep.subr.bf16.mxu0 0
    %457 = vmatpush1.bf16.msra.mxu0 0
    %458 = vmatprep.subr.bf16.mxu0 0
    %459 = vmatpush1.bf16.msra.mxu0 0
    %460 = vmatprep.subr.bf16.mxu0 0
    %461 = vmatpush1.bf16.msra.mxu0 0
    %462 = vmatprep.subr.bf16.mxu0 0
    %463 = vmatpush1.bf16.msra.mxu0 0
    %464 = vmatprep.mubr.bf16.mxu0 0
    %465 = vmatmul.mubr.bf16.gmra.mrb[0].mxu0 %v136
    %v466 = vpop.f32.mrb[0].mxu0
    %v467 = vadd.f32 0.0, %v466
    %v468 = vpop.f32.mrb[0].mxu0
    %v469 = vpop.f32.mrb[0].mxu0
    %v470 = vadd.f32 0.0, %v469
    %v471 = vpop.f32.mrb[0].mxu0
    %472 = vdwg.mxu0
    %v473 = vtanh.pop %v467
    %v474 = vtanh.pop %v470
    %v475 = vpack.c.bf16 %v474, %v473
    %v476 = vld [vmem:[#allocation7] sm:$0xf]
    %v477 = vld [vmem:[#allocation7 + $0x4] sm:$0xf]
    %v478 = vld [vmem:[#allocation7 + $0x8] sm:$0xf]
    %v479 = vld [vmem:[#allocation7 + $0xc] sm:$0xf]
    %v480 = vld [vmem:[#allocation7 + $0x10] sm:$0xf]
    %v481 = vld [vmem:[#allocation7 + $0x14] sm:$0xf]
    %v482 = vld [vmem:[#allocation7 + $0x18] sm:$0xf]
    %v483 = vld [vmem:[#allocation7 + $0x1c] sm:$0xf]
    %v492 = vunpack.c.l.b16 %v476
    %v493 = vunpack.c.l.b16 %v477
    %v494 = vunpack.c.l.b16 %v478
    %v495 = vunpack.c.l.b16 %v479
    %v496 = vunpack.c.l.b16 %v480
    %v497 = vunpack.c.l.b16 %v481
    %v498 = vunpack.c.l.b16 %v482
    %v499 = vunpack.c.l.b16 %v483
    %v500 = vpack.c.b16 %v493, %v492
    %v501 = vpack.c.b16 %v495, %v494
    %v502 = vpack.c.b16 %v497, %v496
    %v503 = vpack.c.b16 %v499, %v498
    %vm508 = vcmask 523264
    %v510 = vsel %vm508, %v475, 0
    %512 = vmatprep.subr.bf16.mxu0 0
    %513 = vmatpush1.bf16.msra.mxu0 %v500
    %514 = vmatprep.subr.bf16.mxu0 0
    %515 = vmatpush1.bf16.msra.mxu0 %v501
    %516 = vmatprep.subr.bf16.mxu0 0
    %517 = vmatpush1.bf16.msra.mxu0 %v502
    %518 = vmatprep.subr.bf16.mxu0 0
    %519 = vmatpush1.bf16.msra.mxu0 %v503
    %520 = vmatprep.subr.bf16.mxu0 0
    %521 = vmatpush1.bf16.msra.mxu0 0
    %522 = vmatprep.subr.bf16.mxu0 0
    %523 = vmatpush1.bf16.msra.mxu0 0
    %524 = vmatprep.subr.bf16.mxu0 0
    %525 = vmatpush1.bf16.msra.mxu0 0
    %526 = vmatprep.subr.bf16.mxu0 0
    %527 = vmatpush1.bf16.msra.mxu0 0
    %528 = vmatprep.subr.bf16.mxu0 0
    %529 = vmatpush1.bf16.msra.mxu0 0
    %530 = vmatprep.subr.bf16.mxu0 0
    %531 = vmatpush1.bf16.msra.mxu0 0
    %532 = vmatprep.subr.bf16.mxu0 0
    %533 = vmatpush1.bf16.msra.mxu0 0
    %534 = vmatprep.subr.bf16.mxu0 0
    %535 = vmatpush1.bf16.msra.mxu0 0
    %536 = vmatprep.subr.bf16.mxu0 0
    %537 = vmatpush1.bf16.msra.mxu0 0
    %538 = vmatprep.subr.bf16.mxu0 0
    %539 = vmatpush1.bf16.msra.mxu0 0
    %540 = vmatprep.subr.bf16.mxu0 0
    %541 = vmatpush1.bf16.msra.mxu0 0
    %542 = vmatprep.subr.bf16.mxu0 0
    %543 = vmatpush1.bf16.msra.mxu0 0
    %544 = vmatprep.mubr.bf16.mxu0 0
    %545 = vmatmul.mubr.bf16.gmra.mrb[0].mxu0 %v510
    %v546 = vpop.f32.mrb[0].mxu0
    %v547 = vadd.f32 0.0, %v546
    %v548 = vpop.f32.mrb[0].mxu0
    %v549 = vpop.f32.mrb[0].mxu0
    %v550 = vadd.f32 0.0, %v549
    %v551 = vpop.f32.mrb[0].mxu0
    %552 = vdwg.mxu0
    %v553 = vpack.c.bf16 %v550, %v547
    %v555 = vunpack.c.l.b16 %v553
    %v556 = vunpack.c.h.b16 %v553
    %v557 = vpack.c.b16 %v555, %v555
    %v558 = vpack.c.b16 %v556, %v556
    %561 = vst [vmem:[#allocation11] sm:$0xf] %v557
    %562 = vst [vmem:[#allocation11 + $0x4] sm:$0xf] %v558
    %v563 = vunpack.c.l.bf16 %v553
    %v564 = vunpack.c.h.bf16 %v553
    %v565 = vlaneseq
    %v566 = vand.u32 %v565, 127
    %v567 = vcvt.s32.f32 %v566
    %vm568 = vcmp.lt.s32.totalorder %v566, 8
    %v569 = vsel %vm568, %v563, -3.4028235e+38
    %v570 = vsel %vm568, %v564, -3.4028235e+38
    %571 = vmax.xlane.f32.xlu0 %v569
    %v572 = vpop.xlane.xlu0 %571
    %573 = vmax.xlane.f32.xlu0 %v570
    %v574 = vpop.xlane.xlu0 %573
    %vm575 = vcmp.eq.f32.partialorder %v569, %v572
    %vm576 = vcmp.eq.f32.partialorder %v570, %v574
    %v577 = vsel %vm575, %v567, 128.0
    %v578 = vsel %vm576, %v567, 128.0
    %579 = vmin.xlane.f32.xlu0 %v577
    %v580 = vpop.xlane.xlu0 %579
    %581 = vmin.xlane.f32.xlu0 %v578
    %v582 = vpop.xlane.xlu0 %581
    %vm583 = vcmp.eq.f32.partialorder %v567, %v580
    %vm584 = vcmp.eq.f32.partialorder %v567, %v582
    %v585 = vsel %vm583, -3.4028235e+38, %v569
    %v586 = vsel %vm584, -3.4028235e+38, %v570
    %587 = vmax.xlane.f32.xlu0 %v585
    %v588 = vpop.xlane.xlu0 %587
    %589 = vmax.xlane.f32.xlu0 %v586
    %v590 = vpop.xlane.xlu0 %589
    %vm591 = vcmp.eq.f32.partialorder %v585, %v588
    %vm592 = vcmp.eq.f32.partialorder %v586, %v590
    %v593 = vsel %vm591, %v567, 128.0
    %v594 = vsel %vm592, %v567, 128.0
    %595 = vmin.xlane.f32.xlu0 %v593
    %v596 = vpop.xlane.xlu0 %595
    %597 = vmin.xlane.f32.xlu0 %v594
    %v598 = vpop.xlane.xlu0 %597
    %v599 = vsub.f32 %v572, %v588
    %v600 = vsub.f32 %v574, %v590
    %v601 = vxor.u32 %v599, 2147483648
    %v602 = vxor.u32 %v600, 2147483648
    %v603 = vmul.f32 %v601, 1.442695
    %v604 = vpow.pop %v603
    %v605 = vmul.f32 %v602, 1.442695
    %v606 = vpow.pop %v605
    %v607 = vadd.f32 %v604, 1.0
    %v608 = vadd.f32 %v606, 1.0
    %v609 = vrcp.pop %v607
    %v610 = vmul.f32 1.0, %v609
    %v611 = vrcp.pop %v608
    %v612 = vmul.f32 1.0, %v611
    %v613 = vsub.f32 1.0, %v610
    %v614 = vsub.f32 1.0, %v612
    %vm615 = vcmp.eq.f32.partialorder %v580, 7.0
    %vm616 = vcmp.eq.f32.partialorder %v582, 7.0
    %vm617 = vcmp.eq.f32.partialorder %v596, 7.0
    %vm618 = vcmp.eq.f32.partialorder %v598, 7.0
    %v619 = vsel %vm617, 1.0, %v610
    %v620 = vsel %vm618, 1.0, %v612
    %v621 = vsel %vm615, 0.0, %v619
    %v622 = vsel %vm616, 0.0, %v620
    %v623 = vsel %vm615, 1.0, %v613
    %v624 = vsel %vm616, 1.0, %v614
    %v625 = vsel %vm617, 0.0, %v623
    %v626 = vsel %vm618, 0.0, %v624
    %vm627 = vcmp.eq.f32.partialorder %v580, 0.0
    %vm628 = vcmp.eq.f32.partialorder %v582, 0.0
    %vm629 = vcmp.eq.f32.partialorder %v596, 0.0
    %vm630 = vcmp.eq.f32.partialorder %v598, 0.0
    %v631 = vsel %vm627, %v621, 0.0
    %v632 = vsel %vm628, %v622, 0.0
    %v633 = vsel %vm629, %v625, 0.0
    %v634 = vsel %vm630, %v626, 0.0
    %v635 = vadd.f32 %v631, %v633
    %v636 = vadd.f32 %v632, %v634
    %vm637 = vcmp.eq.f32.partialorder %v580, 2.0
    %vm638 = vcmp.eq.f32.partialorder %v582, 2.0
    %vm639 = vcmp.eq.f32.partialorder %v596, 2.0
    %vm640 = vcmp.eq.f32.partialorder %v598, 2.0
    %v641 = vsel %vm637, %v621, 0.0
    %v642 = vsel %vm638, %v622, 0.0
    %v643 = vsel %vm639, %v625, 0.0
    %v644 = vsel %vm640, %v626, 0.0
    %v645 = vadd.f32 %v641, %v643
    %v646 = vadd.f32 %v642, %v644
    %vm647 = vcmp.eq.f32.partialorder %v580, 3.0
    %vm648 = vcmp.eq.f32.partialorder %v582, 3.0
    %vm649 = vcmp.eq.f32.partialorder %v596, 3.0
    %vm650 = vcmp.eq.f32.partialorder %v598, 3.0
    %v651 = vsel %vm647, %v621, 0.0
    %v652 = vsel %vm648, %v622, 0.0
    %v653 = vsel %vm649, %v625, 0.0
    %v654 = vsel %vm650, %v626, 0.0
    %v655 = vadd.f32 %v651, %v653
    %v656 = vadd.f32 %v652, %v654
    %vm657 = vcmp.ge.f32.partialorder %v580, 4.0
    %vm658 = vcmp.ge.f32.partialorder %v582, 4.0
    %vm659 = vcmp.ge.f32.partialorder %v596, 4.0
    %vm660 = vcmp.ge.f32.partialorder %v598, 4.0
    %v661 = vsel %vm657, %v621, 0.0
    %v662 = vsel %vm658, %v622, 0.0
    %v663 = vsel %vm659, %v625, 0.0
    %v664 = vsel %vm660, %v626, 0.0
    %v665 = vadd.f32 %v661, %v663
    %v666 = vadd.f32 %v662, %v664
    %v667 = vxor.u32 %v381, 2147483648
    %v668 = vxor.u32 %v383, 2147483648
    %v669 = vxor.u32 %v385, 2147483648
    %v670 = vxor.u32 %v387, 2147483648
    %v671 = vmul.f32 %v667, 1.442695
    %v672 = vpow.pop %v671
    %v673 = vmul.f32 %v668, 1.442695
    %v674 = vpow.pop %v673
    %v675 = vmul.f32 %v669, 1.442695
    %v676 = vpow.pop %v675
    %v677 = vmul.f32 %v670, 1.442695
    %v678 = vpow.pop %v677
    %v679 = vadd.f32 %v672, 1.0
    %v680 = vadd.f32 %v674, 1.0
    %v681 = vadd.f32 %v676, 1.0
    %v682 = vadd.f32 %v678, 1.0
    %v683 = vrcp.pop %v679
    %v684 = vmul.f32 1.0, %v683
    %v685 = vrcp.pop %v680
    %v686 = vmul.f32 1.0, %v685
    %v687 = vrcp.pop %v681
    %v688 = vmul.f32 1.0, %v687
    %v689 = vrcp.pop %v682
    %v690 = vmul.f32 1.0, %v689
    %v691 = vmul.f32 %v381, %v684
    %v692 = vmul.f32 %v383, %v686
    %v693 = vmul.f32 %v385, %v688
    %v694 = vmul.f32 %v387, %v690
    %v695 = vmul.f32 %v691, %v424
    %v696 = vmul.f32 %v692, %v426
    %v697 = vmul.f32 %v693, %v428
    %v698 = vmul.f32 %v694, %v430
    %v699 = vpack.c.bf16 %v697, %v695
    %v700 = vpack.c.bf16 %v698, %v696
    %v701 = vld [vmem:[#allocation8] sm:$0xf]
    %v702 = vld [vmem:[#allocation8 + $0x4] sm:$0xf]
    %v703 = vld [vmem:[#allocation8 + $0x8] sm:$0xf]
    %v704 = vld [vmem:[#allocation8 + $0xc] sm:$0xf]
    %v705 = vld [vmem:[#allocation8 + $0x10] sm:$0xf]
    %v706 = vld [vmem:[#allocation8 + $0x14] sm:$0xf]
    %v707 = vld [vmem:[#allocation8 + $0x18] sm:$0xf]
    %v708 = vld [vmem:[#allocation8 + $0x1c] sm:$0xf]
    %v709 = vld [vmem:[#allocation8 + $0x20] sm:$0xf]
    %v710 = vld [vmem:[#allocation8 + $0x24] sm:$0xf]
    %v711 = vld [vmem:[#allocation8 + $0x28] sm:$0xf]
    %v712 = vld [vmem:[#allocation8 + $0x2c] sm:$0xf]
    %v713 = vld [vmem:[#allocation8 + $0x30] sm:$0xf]
    %v714 = vld [vmem:[#allocation8 + $0x34] sm:$0xf]
    %v715 = vld [vmem:[#allocation8 + $0x38] sm:$0xf]
    %v716 = vld [vmem:[#allocation8 + $0x3c] sm:$0xf]
    %v717 = vld [vmem:[#allocation8 + $0x40] sm:$0xf]
    %v718 = vld [vmem:[#allocation8 + $0x44] sm:$0xf]
    %v719 = vld [vmem:[#allocation8 + $0x48] sm:$0xf]
    %v720 = vld [vmem:[#allocation8 + $0x4c] sm:$0xf]
    %v721 = vld [vmem:[#allocation8 + $0x50] sm:$0xf]
    %v722 = vld [vmem:[#allocation8 + $0x54] sm:$0xf]
    %v723 = vld [vmem:[#allocation8 + $0x58] sm:$0xf]
    %v724 = vld [vmem:[#allocation8 + $0x5c] sm:$0xf]
    %v725 = vld [vmem:[#allocation8 + $0x60] sm:$0xf]
    %v726 = vld [vmem:[#allocation8 + $0x64] sm:$0xf]
    %v727 = vld [vmem:[#allocation8 + $0x68] sm:$0xf]
    %v728 = vld [vmem:[#allocation8 + $0x6c] sm:$0xf]
    %v729 = vld [vmem:[#allocation8 + $0x70] sm:$0xf]
    %v730 = vld [vmem:[#allocation8 + $0x74] sm:$0xf]
    %v731 = vld [vmem:[#allocation8 + $0x78] sm:$0xf]
    %v732 = vld [vmem:[#allocation8 + $0x7c] sm:$0xf]
    %v765 = vunpack.c.l.b16 %v701
    %v766 = vunpack.c.l.b16 %v702
    %v767 = vunpack.c.l.b16 %v703
    %v768 = vunpack.c.l.b16 %v704
    %v769 = vunpack.c.l.b16 %v705
    %v770 = vunpack.c.l.b16 %v706
    %v771 = vunpack.c.l.b16 %v707
    %v772 = vunpack.c.l.b16 %v708
    %v773 = vunpack.c.l.b16 %v709
    %v774 = vunpack.c.l.b16 %v710
    %v775 = vunpack.c.l.b16 %v711
    %v776 = vunpack.c.l.b16 %v712
    %v777 = vunpack.c.l.b16 %v713
    %v778 = vunpack.c.l.b16 %v714
    %v779 = vunpack.c.l.b16 %v715
    %v780 = vunpack.c.l.b16 %v716
    %v781 = vunpack.c.l.b16 %v717
    %v782 = vunpack.c.l.b16 %v718
    %v783 = vunpack.c.l.b16 %v719
    %v784 = vunpack.c.l.b16 %v720
    %v785 = vunpack.c.l.b16 %v721
    %v786 = vunpack.c.l.b16 %v722
    %v787 = vunpack.c.l.b16 %v723
    %v788 = vunpack.c.l.b16 %v724
    %v789 = vunpack.c.l.b16 %v725
    %v790 = vunpack.c.l.b16 %v726
    %v791 = vunpack.c.l.b16 %v727
    %v792 = vunpack.c.l.b16 %v728
    %v793 = vunpack.c.l.b16 %v729
    %v794 = vunpack.c.l.b16 %v730
    %v795 = vunpack.c.l.b16 %v731
    %v796 = vunpack.c.l.b16 %v732
    %v797 = vpack.c.b16 %v766, %v765
    %v798 = vpack.c.b16 %v768, %v767
    %v799 = vpack.c.b16 %v770, %v769
    %v800 = vpack.c.b16 %v772, %v771
    %v801 = vpack.c.b16 %v774, %v773
    %v802 = vpack.c.b16 %v776, %v775
    %v803 = vpack.c.b16 %v778, %v777
    %v804 = vpack.c.b16 %v780, %v779
    %v805 = vpack.c.b16 %v782, %v781
    %v806 = vpack.c.b16 %v784, %v783
    %v807 = vpack.c.b16 %v786, %v785
    %v808 = vpack.c.b16 %v788, %v787
    %v809 = vpack.c.b16 %v790, %v789
    %v810 = vpack.c.b16 %v792, %v791
    %v811 = vpack.c.b16 %v794, %v793
    %v812 = vpack.c.b16 %v796, %v795
    %829 = vmatprep.subr.bf16.mxu0 0
    %830 = vmatpush1.bf16.msra.mxu0 %v797
    %831 = vmatprep.subr.bf16.mxu0 0
    %832 = vmatpush1.bf16.msra.mxu0 %v798
    %833 = vmatprep.subr.bf16.mxu0 0
    %834 = vmatpush1.bf16.msra.mxu0 %v799
    %835 = vmatprep.subr.bf16.mxu0 0
    %836 = vmatpush1.bf16.msra.mxu0 %v800
    %837 = vmatprep.subr.bf16.mxu0 0
    %838 = vmatpush1.bf16.msra.mxu0 %v801
    %839 = vmatprep.subr.bf16.mxu0 0
    %840 = vmatpush1.bf16.msra.mxu0 %v802
    %841 = vmatprep.subr.bf16.mxu0 0
    %842 = vmatpush1.bf16.msra.mxu0 %v803
    %843 = vmatprep.subr.bf16.mxu0 0
    %844 = vmatpush1.bf16.msra.mxu0 %v804
    %845 = vmatprep.subr.bf16.mxu0 0
    %846 = vmatpush1.bf16.msra.mxu0 %v805
    %847 = vmatprep.subr.bf16.mxu0 0
    %848 = vmatpush1.bf16.msra.mxu0 %v806
    %849 = vmatprep.subr.bf16.mxu0 0
    %850 = vmatpush1.bf16.msra.mxu0 %v807
    %851 = vmatprep.subr.bf16.mxu0 0
    %852 = vmatpush1.bf16.msra.mxu0 %v808
    %853 = vmatprep.subr.bf16.mxu0 0
    %854 = vmatpush1.bf16.msra.mxu0 %v809
    %855 = vmatprep.subr.bf16.mxu0 0
    %856 = vmatpush1.bf16.msra.mxu0 %v810
    %857 = vmatprep.subr.bf16.mxu0 0
    %858 = vmatpush1.bf16.msra.mxu0 %v811
    %859 = vmatprep.subr.bf16.mxu0 0
    %860 = vmatpush1.bf16.msra.mxu0 %v812
    %861 = vmatprep.mubr.bf16.mxu0 %v700
    %862 = vmatmul.mubr.bf16.gmra.mrb[0].mxu0 %v699
    %v863 = vpop.f32.mrb[0].mxu0
    %v864 = vadd.f32 0.0, %v863
    %v865 = vpop.f32.mrb[0].mxu0
    %v866 = vpop.f32.mrb[0].mxu0
    %v867 = vadd.f32 0.0, %v866
    %v868 = vpop.f32.mrb[0].mxu0
    %869 = vdwg.mxu0
    %872 = vrot.lane.b32.xlu0 %v467, 127
    %v873 = vpop.permute.xlu0 %872
    %874 = vrot.lane.b32.xlu0 %v470, 127
    %v875 = vpop.permute.xlu0 %874
    %v878 = vsub.f32 %v467, %v873
    %v879 = vsub.f32 %v470, %v875
    %v880 = vxor.u32 %v878, 2147483648
    %v881 = vxor.u32 %v879, 2147483648
    %v882 = vmul.f32 %v880, 1.442695
    %v883 = vpow.pop %v882
    %v884 = vmul.f32 %v881, 1.442695
    %v885 = vpow.pop %v884
    %v886 = vadd.f32 %v883, 1.0
    %v887 = vadd.f32 %v885, 1.0
    %v888 = vrcp.pop %v886
    %v889 = vmul.f32 1.0, %v888
    %v890 = vrcp.pop %v887
    %v891 = vmul.f32 1.0, %v890
    %v892 = vld [vmem:[%s4] sm:$0x3]
    %v893 = vmul.f32 %v645, %v889
    %v894 = vmul.f32 %v646, %v891
    %v895 = vadd.f32 %v635, %v893
    %v896 = vadd.f32 %v636, %v894
    %v897 = vmul.f32 %v655, %v889
    %v898 = vmul.f32 %v656, %v891
    %901 = vrot.lane.b32.xlu0 %v897, 126
    %v902 = vpop.permute.xlu0 %901
    %903 = vrot.lane.b32.xlu0 %v898, 126
    %v904 = vpop.permute.xlu0 %903
    %v907 = vadd.f32 %v895, %v902
    %v908 = vadd.f32 %v896, %v904
    %v909 = vsub.f32 1.0, %v889
    %v910 = vsub.f32 1.0, %v891
    %v911 = vmul.f32 %v645, %v909
    %v912 = vmul.f32 %v646, %v910
    %v913 = vmul.f32 %v655, %v909
    %v914 = vmul.f32 %v656, %v910
    %916 = vset.pattern.permute.xlu0 64
    %917 = vperm.xlu0 %916, %v907
    %v918 = vpop.permute.xlu0 %917
    %921 = vset.pattern.permute.xlu0 64
    %922 = vperm.xlu0 %921, %v908
    %v923 = vpop.permute.xlu0 %922
    %v925 = vmul.f32 %v918, %v82
    %v926 = vmul.f32 %v923, %v83
    %v927 = vmul.f32 %v665, %v864
    %v928 = vmul.f32 %v666, %v867
    %v929 = vadd.f32 %v925, %v927
    %v930 = vadd.f32 %v926, %v928
    %932 = vset.pattern.permute.xlu0 64
    %933 = vperm.xlu0 %932, %v911
    %v934 = vpop.permute.xlu0 %933
    %937 = vset.pattern.permute.xlu0 64
    %938 = vperm.xlu0 %937, %v912
    %v939 = vpop.permute.xlu0 %938
    %v941 = vlaneseq
    %v942 = vshrl.u32 %v941, 7
    %v943 = vsub.s32 0, %v942
    %v944 = vrot.slane %v892, %v943
    %v945 = vmul.f32 %v934, %v944
    %v946 = vmul.f32 %v939, %v944
    %v947 = vadd.f32 %v929, %v945
    %v948 = vadd.f32 %v930, %v946
    %950 = vset.pattern.permute.xlu0 66
    %951 = vperm.xlu0 %950, %v913
    %v952 = vpop.permute.xlu0 %951
    %955 = vset.pattern.permute.xlu0 66
    %956 = vperm.xlu0 %955, %v914
    %v957 = vpop.permute.xlu0 %956
    %v959 = vlaneseq
    %v960 = vshrl.u32 %v959, 7
    %v961 = vsub.s32 1, %v960
    %v962 = vrot.slane %v892, %v961
    %v963 = vmul.f32 %v952, %v962
    %v964 = vmul.f32 %v957, %v962
    %v965 = vadd.f32 %v947, %v963
    %v966 = vadd.f32 %v948, %v964
    %967 = vst [vmem:[#allocation10] sm:$0xff] %v965
    %968 = vst [vmem:[#allocation10 + $0x8] sm:$0xff] %v966
    // Predicated region
    $region38: #{tpu_custom_call.1} parent=1 // pred_check
      _
    $region39: #{tpu_custom_call.1} parent=1 // pred_check_branch
      %970 = sbr.rel (0) target = $region41
    $region40: #{tpu_custom_call.1} parent=1 // pred_region
      %s972 = ssub.s32 256, 256
      %973 = vsyncadd [#allocation4], %s972
      %s974 = sshll.u32 [#allocation10], 4
      %s975 = int_to_ptr.vmem [resolvable:$true] %s974
      %980 = dma.vmem_to_hbm [thread:$0]  %s975, 256, %s5, [#allocation4], 128, 128, 8
    $region41: #{tpu_custom_call.1} parent=1 // pred_fallthru
      _
    // Predicated region
    $region42: #{tpu_custom_call.1} parent=1 // pred_check
      _
    $region43: #{tpu_custom_call.1} parent=1 // pred_check_branch
      %982 = sbr.rel (0) target = $region45
    $region44: #{tpu_custom_call.1} parent=1 // pred_region
      %s984 = ssub.s32 128, 128
      %985 = vsyncadd [#allocation12], %s984
      %s986 = sshll.u32 [#allocation11], 4
      %s987 = int_to_ptr.vmem [resolvable:$true] %s986
      %992 = dma.vmem_to_hbm [thread:$0]  %s987, 128, %s6, [#allocation12], 64, 64, 4
    $region45: #{tpu_custom_call.1} parent=1 // pred_fallthru
      _
    // Predicated region
    $region46: #{tpu_custom_call.1} parent=1 // pred_check
      _
    $region47: #{tpu_custom_call.1} parent=1 // pred_check_branch
      %994 = sbr.rel (0) target = $region49
    $region48: #{tpu_custom_call.1} parent=1 // pred_region
      %995 = dma.done [#allocation4], 256
    $region49: #{tpu_custom_call.1} parent=1 // pred_fallthru
      _
    // Predicated region
    $region50: #{tpu_custom_call.1} parent=1 // pred_check
      _
    $region51: #{tpu_custom_call.1} parent=1 // pred_check_branch
      %997 = sbr.rel (0) target = $region53
    $region52: #{tpu_custom_call.1} parent=1 // pred_region
      %998 = dma.done [#allocation12], 128
    $region53: #{tpu_custom_call.1} parent=1 // pred_fallthru
      _
    %999 = vsyncpa [#allocation3], 1
    %1000 = vsyncpa [#allocation6], 1
    %1001 = vsyncpa [#allocation9], 1
    %1002 = vsyncpa [#allocation4], 1
    %1003 = vsyncpa [#allocation12], 1

</llo_original>
